<compile_context>
chip_gen: v7x
topology: tpu7x:2x2x1
jax: 0.10.0
libtpu: 0.0.40
codegen_flags: <defaults>
</compile_context>

<pallas_src>
import jax
import jax.numpy as jnp
from jax.experimental import pallas as pl
from jax.experimental.pallas import tpu as pltpu

LANE = 128   # vreg lane width
SUB = 8      # vreg sublane width
_MIB = 1 << 20


def _round_up(n, m):
    return ((n + m - 1) // m) * m


def _pad2(a, rows, cols):
    return jnp.pad(a, ((0, rows - a.shape[0]), (0, cols - a.shape[1])))


def _num_tensorcores():
    """v7x has 2 TensorCores per chip; v5e/v6e have 1. Best-effort detection."""
    try:
        kind = jax.devices()[0].device_kind.lower()
    except Exception:
        return 1
    return 2 if "7" in kind else 1


# -----------------------------------------------------------------------------
# Kernel
# -----------------------------------------------------------------------------
def _vae_forward_kernel(
    x_ref, eps_ref,
    w1_ref, b1_ref,
    w2_ref, b2_ref,      # fused [w21 | w22], [b21 | b22]
    w3_ref, b3_ref,
    w4_ref, b4_ref,
    recon_ref, mulv_ref,
):
    out_p = eps_ref.shape[1]          # padded latent width (lane-aligned)

    # ---- encoder ----
    x = x_ref[...].astype(jnp.bfloat16)          # cast is free VPU filler
    h1 = jnp.dot(x, w1_ref[...],
                 preferred_element_type=jnp.float32) + b1_ref[...]
    h1 = jnp.maximum(h1, 0.0).astype(jnp.bfloat16)

    # fused mu/logvar projection: one MXU push, one lane-dense 2*OUT_P store
    mulv = jnp.dot(h1, w2_ref[...],
                   preferred_element_type=jnp.float32) + b2_ref[...]
    mulv_ref[...] = mulv
    mu = mulv[:, :out_p]              # lane-aligned static slices
    logvar = mulv[:, out_p:]

    # ---- reparameterize (f32 math, exp on EUP) ----
    std = jnp.exp(0.5 * logvar)
    z = (eps_ref[...].astype(jnp.float32) * std + mu).astype(jnp.bfloat16)

    # ---- decoder ----
    h3 = jnp.dot(z, w3_ref[...],
                 preferred_element_type=jnp.float32) + b3_ref[...]
    h3 = jnp.maximum(h3, 0.0).astype(jnp.bfloat16)

    logits = jnp.dot(h3, w4_ref[...],
                     preferred_element_type=jnp.float32) + b4_ref[...]

    # Numerically stable logistic:
    #   x >= 0: 1 / (1 + exp(-x));  x < 0: exp(x) / (1 + exp(x))
    # exp(-|x|) never overflows; approx reciprocal stays on the EUP slot.
    e = jnp.exp(-jnp.abs(logits))
    num = jnp.where(logits >= 0.0, 1.0, e)
    sig = num * pl.reciprocal(1.0 + e, approx=True)
    recon_ref[...] = jnp.clip(sig, 0.0, 1.0).astype(recon_ref.dtype)


# -----------------------------------------------------------------------------
# Param packing: pad to lane multiples, fuse mu/logvar weights, cast to bf16
# -----------------------------------------------------------------------------
def pack_params(p, input_size, hidden_size, output_size):
    in_p = _round_up(input_size, LANE)
    hid_p = _round_up(hidden_size, LANE)
    out_p = _round_up(output_size, LANE)

    w1 = _pad2(p["w1"], in_p, hid_p).astype(jnp.bfloat16)
    b1 = _pad2(p["b1"], 1, hid_p)
    w2 = jnp.concatenate(
        [_pad2(p["w21"], hid_p, out_p), _pad2(p["w22"], hid_p, out_p)],
        axis=1).astype(jnp.bfloat16)
    b2 = jnp.concatenate(
        [_pad2(p["b21"], 1, out_p), _pad2(p["b22"], 1, out_p)], axis=1)
    w3 = _pad2(p["w3"], out_p, hid_p).astype(jnp.bfloat16)
    b3 = _pad2(p["b3"], 1, hid_p)
    w4 = _pad2(p["w4"], hid_p, in_p).astype(jnp.bfloat16)
    b4 = _pad2(p["b4"], 1, in_p)
    return dict(w1=w1, b1=b1, w2=w2, b2=b2, w3=w3, b3=b3, w4=w4, b4=b4,
                dims=(in_p, hid_p, out_p))


def _prep_activation(a, rows, cols):
    """Pad to (rows, cols). If a padded copy must be materialized anyway, also
    cast it to bf16 in the same fused op so the kernel reads half the bytes.
    If no padding is needed, stream the array as-is (kernel casts on the VPU)
    so no extra HBM round trip is spent on a standalone cast."""
    if a.shape == (rows, cols):
        return a
    return _pad2(a, rows, cols).astype(jnp.bfloat16)


# -----------------------------------------------------------------------------
# Wrapper
# -----------------------------------------------------------------------------
def vae_forward(x, eps, packed, *, tile_b=2048):
    """Fused VAE forward.

    x:   [B, input_size]  (f32 or bf16)
    eps: [B, output_size] reparameterization noise (bf16 preferred)
    Returns (recon bf16, mu f32, logvar f32).

    tile_b: batch rows per grid step. Guidance:
      v5e/v6e (128 MiB VMEM, 1 TC): up to ~4096-8192 is fine (sweep).
      v7x     (64 MiB VMEM, 2 TCs): keep <= ~2048 and let the grid be >= 2
              so both TensorCores get work (handled automatically below).
    """
    in_p, hid_p, out_p = packed["dims"]
    B, input_size = x.shape
    output_size = eps.shape[1]
    n_cores = _num_tensorcores()

    # ---- choose batch tile ----
    b_aligned = _round_up(B, SUB)
    tb = min(_round_up(tile_b, SUB), b_aligned)
    # give every TensorCore at least one grid step (v7x: 2 TCs)
    if n_cores > 1 and b_aligned > SUB and (b_aligned + tb - 1) // tb < n_cores:
        tb = _round_up((b_aligned + n_cores - 1) // n_cores, SUB)

    def footprint(t):
        # conservative per-step VMEM estimate (bytes)
        weights = 2 * (in_p * hid_p + hid_p * 2 * out_p + out_p * hid_p + hid_p * in_p)
        biases = 4 * (2 * hid_p + 2 * out_p + in_p)
        streams = 2 * t * (in_p * 4 + out_p * 4 + in_p * 2 + 2 * out_p * 4)   # dbl-buffered io
        interm = t * (2 * hid_p + 3 * out_p + in_p) * 4                       # live f32 temps
        return weights + biases + streams + interm

    # stay comfortably inside every generation's scoped VMEM
    while tb > SUB and footprint(tb) > 40 * _MIB:
        tb = _round_up(tb // 2, SUB)

    b_p = _round_up(B, tb)
    grid = (b_p // tb,)
    vmem_limit = int(min(48 * _MIB, max(32 * _MIB, 2 * footprint(tb))))

    x_p = _prep_activation(x, b_p, in_p)
    eps_p = _prep_activation(eps, b_p, out_p)

    def row_spec(cols):
        return pl.BlockSpec((tb, cols), lambda i: (i, 0))

    def resident_spec(shape, single_buffer):
        # constant index_map -> weights/biases stay VMEM-resident across the
        # batch grid; Buffered(1) avoids double-buffering blocks that never change.
        if single_buffer:
            return pl.BlockSpec(shape, lambda i: (0, 0),
                                pipeline_mode=pl.Buffered(1))
        return pl.BlockSpec(shape, lambda i: (0, 0))

    def build(single_buffer_weights):
        return pl.pallas_call(
            _vae_forward_kernel,
            out_shape=(
                jax.ShapeDtypeStruct((b_p, in_p), jnp.bfloat16),      # recon (padded)
                jax.ShapeDtypeStruct((b_p, 2 * out_p), jnp.float32),  # [mu | logvar]
            ),
            grid_spec=pltpu.PrefetchScalarGridSpec(
                num_scalar_prefetch=0,
                grid=grid,
                in_specs=[
                    row_spec(in_p), row_spec(out_p),
                    resident_spec(packed["w1"].shape, single_buffer_weights),
                    resident_spec(packed["b1"].shape, single_buffer_weights),
                    resident_spec(packed["w2"].shape, single_buffer_weights),
                    resident_spec(packed["b2"].shape, single_buffer_weights),
                    resident_spec(packed["w3"].shape, single_buffer_weights),
                    resident_spec(packed["b3"].shape, single_buffer_weights),
                    resident_spec(packed["w4"].shape, single_buffer_weights),
                    resident_spec(packed["b4"].shape, single_buffer_weights),
                ],
                out_specs=[row_spec(in_p), row_spec(2 * out_p)],
            ),
            compiler_params=pltpu.CompilerParams(
                dimension_semantics=("parallel",),
                vmem_limit_bytes=vmem_limit),
        )

    args = (x_p, eps_p,
            packed["w1"], packed["b1"], packed["w2"], packed["b2"],
            packed["w3"], packed["b3"], packed["w4"], packed["b4"])

    try:
        recon_p, mulv_p = build(True)(*args)
    except Exception:
        # pipeline_mode=pl.Buffered(1) unsupported on this jax/libtpu combo;
        # fall back to default (double-buffered) resident blocks.
        recon_p, mulv_p = build(False)(*args)

    recon = recon_p[:B, :input_size]
    mu = mulv_p[:B, :output_size]
    logvar = mulv_p[:B, out_p:out_p + output_size]
    return recon, mu, logvar


# -----------------------------------------------------------------------------
# Init & reference
# -----------------------------------------------------------------------------
def init_params(key, input_size, hidden_size, output_size):
    """Deterministic init mimicking nn.Linear (uniform in +/- 1/sqrt(fan_in)).
    Weights stored pre-transposed as [in, out]."""
    def linear(k, fan_in, fan_out):
        kw, kb = jax.random.split(k)
        bound = 1.0 / jnp.sqrt(float(fan_in))
        w = jax.random.uniform(kw, (fan_in, fan_out), jnp.float32, -bound, bound)
        b = jax.random.uniform(kb, (1, fan_out), jnp.float32, -bound, bound)
        return w, b

    keys = jax.random.split(key, 5)
    w1, b1 = linear(keys[0], input_size, hidden_size)
    w21, b21 = linear(keys[1], hidden_size, output_size)
    w22, b22 = linear(keys[2], hidden_size, output_size)
    w3, b3 = linear(keys[3], output_size, hidden_size)
    w4, b4 = linear(keys[4], hidden_size, input_size)
    # TODO(synk): fc42 exists in __init__ but is unused by forward(); omitted.
    return dict(w1=w1, b1=b1, w21=w21, b21=b21, w22=w22, b22=b22,
                w3=w3, b3=b3, w4=w4, b4=b4)


def vae_forward_ref(x, eps, p):
    """Pure-JAX f32 reference for correctness check."""
    h1 = jnp.maximum(x @ p["w1"] + p["b1"], 0.0)
    mu = h1 @ p["w21"] + p["b21"]
    logvar = h1 @ p["w22"] + p["b22"]
    z = eps * jnp.exp(0.5 * logvar) + mu
    h3 = jnp.maximum(z @ p["w3"] + p["b3"], 0.0)
    recon = jax.nn.sigmoid(h3 @ p["w4"] + p["b4"])
    return recon, mu, logvar


if __name__ == "__main__":
    # Small shapes consistent with the module: Linear stack on [B, input_size].
    batch = 8
    input_size = 64
    hidden_size = 32
    output_size = 16

    key = jax.random.PRNGKey(0)
    k_params, k_x, k_eps = jax.random.split(key, 3)

    params = init_params(k_params, input_size, hidden_size, output_size)
    packed = pack_params(params, input_size, hidden_size, output_size)

    x = jax.random.uniform(k_x, (batch, input_size), jnp.float32)        # "image" in [0,1)
    # eps streamed in bf16: the largest per-row input; z is cast to bf16 before
    # the decoder matmul anyway so precision impact is below test tolerance.
    eps = jax.random.normal(k_eps, (batch, output_size), jnp.bfloat16)   # reparam noise

    recon, mu, logvar = vae_forward(x, eps, packed)
    jax.block_until_ready((recon, mu, logvar))

    # sanity check against pure-JAX f32 reference (bf16 matmul operands / eps /
    # recon + approx reciprocal -> loosened tolerance)
    r_ref, mu_ref, lv_ref = vae_forward_ref(x, eps.astype(jnp.float32), params)
    assert jnp.allclose(recon.astype(jnp.float32), r_ref, atol=3e-2), "recon mismatch"
    assert jnp.allclose(mu, mu_ref, atol=3e-2), "mu mismatch"
    assert jnp.allclose(logvar, lv_ref, atol=3e-2), "logvar mismatch"

    print("KERNEL_OK")
</pallas_src>

<mosaic_0001>
module attributes {stable_mosaic.version = 11 : i64} {
  func.func @_vae_forward_kernel(%arg0: i32, %arg1: memref<8x128xbf16, #tpu.memory_space<vmem>>, %arg2: memref<8x128xbf16, #tpu.memory_space<vmem>>, %arg3: memref<128x128xbf16, #tpu.memory_space<vmem>>, %arg4: memref<1x128xf32, #tpu.memory_space<vmem>>, %arg5: memref<128x256xbf16, #tpu.memory_space<vmem>>, %arg6: memref<1x256xf32, #tpu.memory_space<vmem>>, %arg7: memref<128x128xbf16, #tpu.memory_space<vmem>>, %arg8: memref<1x128xf32, #tpu.memory_space<vmem>>, %arg9: memref<128x128xbf16, #tpu.memory_space<vmem>>, %arg10: memref<1x128xf32, #tpu.memory_space<vmem>>, %arg11: memref<8x128xbf16, #tpu.memory_space<vmem>>, %arg12: memref<8x256xf32, #tpu.memory_space<vmem>>) attributes {dimension_semantics = [#tpu.dimension_semantics<parallel>], iteration_bounds = array<i64: 1>, scalar_prefetch = 0 : i64, scratch_operands = 0 : i64, tpu.core_type = #tpu.core_type<tc>, window_params = [{transform_indices = @transform_0, window_bounds = array<i64: 8, 128>}, {transform_indices = @transform_1, window_bounds = array<i64: 8, 128>}, {pipeline_mode = #tpu.pipeline_mode<synchronous>, transform_indices = @transform_2, window_bounds = array<i64: 128, 128>}, {pipeline_mode = #tpu.pipeline_mode<synchronous>, transform_indices = @transform_3, window_bounds = array<i64: 1, 128>}, {pipeline_mode = #tpu.pipeline_mode<synchronous>, transform_indices = @transform_4, window_bounds = array<i64: 128, 256>}, {pipeline_mode = #tpu.pipeline_mode<synchronous>, transform_indices = @transform_5, window_bounds = array<i64: 1, 256>}, {pipeline_mode = #tpu.pipeline_mode<synchronous>, transform_indices = @transform_6, window_bounds = array<i64: 128, 128>}, {pipeline_mode = #tpu.pipeline_mode<synchronous>, transform_indices = @transform_7, window_bounds = array<i64: 1, 128>}, {pipeline_mode = #tpu.pipeline_mode<synchronous>, transform_indices = @transform_8, window_bounds = array<i64: 128, 128>}, {pipeline_mode = #tpu.pipeline_mode<synchronous>, transform_indices = @transform_9, window_bounds = array<i64: 1, 128>}, {transform_indices = @transform_10, window_bounds = array<i64: 8, 128>}, {transform_indices = @transform_11, window_bounds = array<i64: 8, 256>}]} {
    %c0 = arith.constant 0 : index
    %c0_0 = arith.constant 0 : index
    %0 = vector.load %arg1[%c0, %c0_0] : memref<8x128xbf16, #tpu.memory_space<vmem>>, vector<8x128xbf16>
    %c0_1 = arith.constant 0 : index
    %c0_2 = arith.constant 0 : index
    %1 = vector.load %arg3[%c0_1, %c0_2] : memref<128x128xbf16, #tpu.memory_space<vmem>>, vector<128x128xbf16>
    %cst = arith.constant dense<0.000000e+00> : vector<8x128xf32>
    %2 = tpu.matmul %0, %1, %cst {dimension_numbers = #tpu.dot_dimension_numbers<[1], [0], [0], [1], [0, 0, 1, 1], [], []>} : vector<8x128xbf16>, vector<128x128xbf16>, vector<8x128xf32> -> vector<8x128xf32>
    %c0_3 = arith.constant 0 : index
    %c0_4 = arith.constant 0 : index
    %3 = vector.load %arg4[%c0_3, %c0_4] : memref<1x128xf32, #tpu.memory_space<vmem>>, vector<1x128xf32>
    %4 = vector.broadcast %3 : vector<1x128xf32> to vector<8x128xf32>
    %5 = arith.addf %2, %4 : vector<8x128xf32>
    %cst_5 = arith.constant 0.000000e+00 : f32
    %6 = vector.broadcast %cst_5 : f32 to vector<8x128xf32>
    %7 = arith.maximumf %5, %6 : vector<8x128xf32>
    %8 = arith.truncf %7 : vector<8x128xf32> to vector<8x128xbf16>
    %c0_6 = arith.constant 0 : index
    %c0_7 = arith.constant 0 : index
    %9 = vector.load %arg5[%c0_6, %c0_7] : memref<128x256xbf16, #tpu.memory_space<vmem>>, vector<128x256xbf16>
    %cst_8 = arith.constant dense<0.000000e+00> : vector<8x256xf32>
    %10 = tpu.matmul %8, %9, %cst_8 {dimension_numbers = #tpu.dot_dimension_numbers<[1], [0], [0], [1], [0, 0, 1, 1], [], []>} : vector<8x128xbf16>, vector<128x256xbf16>, vector<8x256xf32> -> vector<8x256xf32>
    %c0_9 = arith.constant 0 : index
    %c0_10 = arith.constant 0 : index
    %11 = vector.load %arg6[%c0_9, %c0_10] : memref<1x256xf32, #tpu.memory_space<vmem>>, vector<1x256xf32>
    %12 = vector.broadcast %11 : vector<1x256xf32> to vector<8x256xf32>
    %13 = arith.addf %10, %12 : vector<8x256xf32>
    %c0_11 = arith.constant 0 : index
    %c0_12 = arith.constant 0 : index
    %14 = vector.load %arg12[%c0_11, %c0_12] : memref<8x256xf32, #tpu.memory_space<vmem>>, vector<8x256xf32>
    tpu.vector_store %arg12[%c0_11, %c0_12], %13 {strides = array<i32>} : memref<8x256xf32, #tpu.memory_space<vmem>>, vector<8x256xf32>,
    %15 = vector.extract_strided_slice %13 {offsets = [0, 0], sizes = [8, 128], strides = [1, 1]} : vector<8x256xf32> to vector<8x128xf32>
    %16 = vector.extract_strided_slice %13 {offsets = [0, 128], sizes = [8, 128], strides = [1, 1]} : vector<8x256xf32> to vector<8x128xf32>
    %cst_13 = arith.constant 5.000000e-01 : f32
    %17 = vector.broadcast %cst_13 : f32 to vector<8x128xf32>
    %18 = arith.mulf %17, %16 : vector<8x128xf32>
    %19 = math.exp %18 : vector<8x128xf32>
    %c0_14 = arith.constant 0 : index
    %c0_15 = arith.constant 0 : index
    %20 = vector.load %arg2[%c0_14, %c0_15] : memref<8x128xbf16, #tpu.memory_space<vmem>>, vector<8x128xbf16>
    %21 = arith.extf %20 : vector<8x128xbf16> to vector<8x128xf32>
    %22 = arith.mulf %21, %19 : vector<8x128xf32>
    %23 = arith.addf %22, %15 : vector<8x128xf32>
    %24 = arith.truncf %23 : vector<8x128xf32> to vector<8x128xbf16>
    %c0_16 = arith.constant 0 : index
    %c0_17 = arith.constant 0 : index
    %25 = vector.load %arg7[%c0_16, %c0_17] : memref<128x128xbf16, #tpu.memory_space<vmem>>, vector<128x128xbf16>
    %cst_18 = arith.constant dense<0.000000e+00> : vector<8x128xf32>
    %26 = tpu.matmul %24, %25, %cst_18 {dimension_numbers = #tpu.dot_dimension_numbers<[1], [0], [0], [1], [0, 0, 1, 1], [], []>} : vector<8x128xbf16>, vector<128x128xbf16>, vector<8x128xf32> -> vector<8x128xf32>
    %c0_19 = arith.constant 0 : index
    %c0_20 = arith.constant 0 : index
    %27 = vector.load %arg8[%c0_19, %c0_20] : memref<1x128xf32, #tpu.memory_space<vmem>>, vector<1x128xf32>
    %28 = vector.broadcast %27 : vector<1x128xf32> to vector<8x128xf32>
    %29 = arith.addf %26, %28 : vector<8x128xf32>
    %cst_21 = arith.constant 0.000000e+00 : f32
    %30 = vector.broadcast %cst_21 : f32 to vector<8x128xf32>
    %31 = arith.maximumf %29, %30 : vector<8x128xf32>
    %32 = arith.truncf %31 : vector<8x128xf32> to vector<8x128xbf16>
    %c0_22 = arith.constant 0 : index
    %c0_23 = arith.constant 0 : index
    %33 = vector.load %arg9[%c0_22, %c0_23] : memref<128x128xbf16, #tpu.memory_space<vmem>>, vector<128x128xbf16>
    %cst_24 = arith.constant dense<0.000000e+00> : vector<8x128xf32>
    %34 = tpu.matmul %32, %33, %cst_24 {dimension_numbers = #tpu.dot_dimension_numbers<[1], [0], [0], [1], [0, 0, 1, 1], [], []>} : vector<8x128xbf16>, vector<128x128xbf16>, vector<8x128xf32> -> vector<8x128xf32>
    %c0_25 = arith.constant 0 : index
    %c0_26 = arith.constant 0 : index
    %35 = vector.load %arg10[%c0_25, %c0_26] : memref<1x128xf32, #tpu.memory_space<vmem>>, vector<1x128xf32>
    %36 = vector.broadcast %35 : vector<1x128xf32> to vector<8x128xf32>
    %37 = arith.addf %34, %36 : vector<8x128xf32>
    %38 = math.absf %37 : vector<8x128xf32>
    %cst_27 = arith.constant 0.000000e+00 : f32
    %39 = vector.broadcast %cst_27 : f32 to vector<8x128xf32>
    %40 = arith.subf %39, %38 : vector<8x128xf32>
    %41 = math.exp %40 : vector<8x128xf32>
    %cst_28 = arith.constant 0.000000e+00 : f32
    %42 = vector.broadcast %cst_28 : f32 to vector<8x128xf32>
    %43 = arith.cmpf oge, %37, %42 : vector<8x128xf32>
    %cst_29 = arith.constant 1.000000e+00 : f32
    %44 = vector.broadcast %cst_29 : f32 to vector<8x128xf32>
    %45 = arith.select %43, %44, %41 : vector<8x128xi1>, vector<8x128xf32>
    %cst_30 = arith.constant 1.000000e+00 : f32
    %46 = vector.broadcast %cst_30 : f32 to vector<8x128xf32>
    %47 = arith.addf %46, %41 : vector<8x128xf32>
    %48 = tpu.reciprocal %47 {approx = true} : vector<8x128xf32> -> vector<8x128xf32>
    %49 = arith.mulf %45, %48 : vector<8x128xf32>
    %cst_31 = arith.constant 0.000000e+00 : f32
    %cst_32 = arith.constant 1.000000e+00 : f32
    %50 = vector.broadcast %cst_31 : f32 to vector<8x128xf32>
    %51 = arith.maximumf %50, %49 : vector<8x128xf32>
    %52 = vector.broadcast %cst_32 : f32 to vector<8x128xf32>
    %53 = arith.minimumf %52, %51 : vector<8x128xf32>
    %54 = arith.truncf %53 : vector<8x128xf32> to vector<8x128xbf16>
    %c0_33 = arith.constant 0 : index
    %c0_34 = arith.constant 0 : index
    %55 = vector.load %arg11[%c0_33, %c0_34] : memref<8x128xbf16, #tpu.memory_space<vmem>>, vector<8x128xbf16>
    tpu.vector_store %arg11[%c0_33, %c0_34], %54 {strides = array<i32>} : memref<8x128xbf16, #tpu.memory_space<vmem>>, vector<8x128xbf16>,
    return
  }
  func.func @transform_0(%arg0: i32) -> (i32, i32) {
    %c0_i32 = arith.constant 0 : i32
    %c0_i32_0 = arith.constant 0 : i32
    return %arg0, %c0_i32 : i32, i32
  }
  func.func @transform_1(%arg0: i32) -> (i32, i32) {
    %c0_i32 = arith.constant 0 : i32
    %c0_i32_0 = arith.constant 0 : i32
    return %arg0, %c0_i32 : i32, i32
  }
  func.func @transform_2(%arg0: i32) -> (i32, i32) {
    %c0_i32 = arith.constant 0 : i32
    %c0_i32_0 = arith.constant 0 : i32
    %c0_i32_1 = arith.constant 0 : i32
    return %c0_i32, %c0_i32_0 : i32, i32
  }
  func.func @transform_3(%arg0: i32) -> (i32, i32) {
    %c0_i32 = arith.constant 0 : i32
    %c0_i32_0 = arith.constant 0 : i32
    %c0_i32_1 = arith.constant 0 : i32
    return %c0_i32, %c0_i32_0 : i32, i32
  }
  func.func @transform_4(%arg0: i32) -> (i32, i32) {
    %c0_i32 = arith.constant 0 : i32
    %c0_i32_0 = arith.constant 0 : i32
    %c0_i32_1 = arith.constant 0 : i32
    return %c0_i32, %c0_i32_0 : i32, i32
  }
  func.func @transform_5(%arg0: i32) -> (i32, i32) {
    %c0_i32 = arith.constant 0 : i32
    %c0_i32_0 = arith.constant 0 : i32
    %c0_i32_1 = arith.constant 0 : i32
    return %c0_i32, %c0_i32_0 : i32, i32
  }
  func.func @transform_6(%arg0: i32) -> (i32, i32) {
    %c0_i32 = arith.constant 0 : i32
    %c0_i32_0 = arith.constant 0 : i32
    %c0_i32_1 = arith.constant 0 : i32
    return %c0_i32, %c0_i32_0 : i32, i32
  }
  func.func @transform_7(%arg0: i32) -> (i32, i32) {
    %c0_i32 = arith.constant 0 : i32
    %c0_i32_0 = arith.constant 0 : i32
    %c0_i32_1 = arith.constant 0 : i32
    return %c0_i32, %c0_i32_0 : i32, i32
  }
  func.func @transform_8(%arg0: i32) -> (i32, i32) {
    %c0_i32 = arith.constant 0 : i32
    %c0_i32_0 = arith.constant 0 : i32
    %c0_i32_1 = arith.constant 0 : i32
    return %c0_i32, %c0_i32_0 : i32, i32
  }
  func.func @transform_9(%arg0: i32) -> (i32, i32) {
    %c0_i32 = arith.constant 0 : i32
    %c0_i32_0 = arith.constant 0 : i32
    %c0_i32_1 = arith.constant 0 : i32
    return %c0_i32, %c0_i32_0 : i32, i32
  }
  func.func @transform_10(%arg0: i32) -> (i32, i32) {
    %c0_i32 = arith.constant 0 : i32
    %c0_i32_0 = arith.constant 0 : i32
    return %arg0, %c0_i32 : i32, i32
  }
  func.func @transform_11(%arg0: i32) -> (i32, i32) {
    %c0_i32 = arith.constant 0 : i32
    %c0_i32_0 = arith.constant 0 : i32
    return %arg0, %c0_i32 : i32, i32
  }
}

module attributes {stable_mosaic.version = 11 : i64} {
  func.func @_vae_forward_kernel(%arg0: i32, %arg1: memref<8x128xbf16, #tpu.memory_space<vmem>>, %arg2: memref<8x128xbf16, #tpu.memory_space<vmem>>, %arg3: memref<128x128xbf16, #tpu.memory_space<vmem>>, %arg4: memref<1x128xf32, #tpu.memory_space<vmem>>, %arg5: memref<128x256xbf16, #tpu.memory_space<vmem>>, %arg6: memref<1x256xf32, #tpu.memory_space<vmem>>, %arg7: memref<128x128xbf16, #tpu.memory_space<vmem>>, %arg8: memref<1x128xf32, #tpu.memory_space<vmem>>, %arg9: memref<128x128xbf16, #tpu.memory_space<vmem>>, %arg10: memref<1x128xf32, #tpu.memory_space<vmem>>, %arg11: memref<8x128xbf16, #tpu.memory_space<vmem>>, %arg12: memref<8x256xf32, #tpu.memory_space<vmem>>) attributes {dimension_semantics = [#tpu.dimension_semantics<parallel>], iteration_bounds = array<i64: 1>, scalar_prefetch = 0 : i64, scratch_operands = 0 : i64, tpu.core_type = #tpu.core_type<tc>, window_params = [{transform_indices = @transform_0, window_bounds = array<i64: 8, 128>}, {transform_indices = @transform_1, window_bounds = array<i64: 8, 128>}, {pipeline_mode = #tpu.pipeline_mode<synchronous>, transform_indices = @transform_2, window_bounds = array<i64: 128, 128>}, {pipeline_mode = #tpu.pipeline_mode<synchronous>, transform_indices = @transform_3, window_bounds = array<i64: 1, 128>}, {pipeline_mode = #tpu.pipeline_mode<synchronous>, transform_indices = @transform_4, window_bounds = array<i64: 128, 256>}, {pipeline_mode = #tpu.pipeline_mode<synchronous>, transform_indices = @transform_5, window_bounds = array<i64: 1, 256>}, {pipeline_mode = #tpu.pipeline_mode<synchronous>, transform_indices = @transform_6, window_bounds = array<i64: 128, 128>}, {pipeline_mode = #tpu.pipeline_mode<synchronous>, transform_indices = @transform_7, window_bounds = array<i64: 1, 128>}, {pipeline_mode = #tpu.pipeline_mode<synchronous>, transform_indices = @transform_8, window_bounds = array<i64: 128, 128>}, {pipeline_mode = #tpu.pipeline_mode<synchronous>, transform_indices = @transform_9, window_bounds = array<i64: 1, 128>}, {transform_indices = @transform_10, window_bounds = array<i64: 8, 128>}, {transform_indices = @transform_11, window_bounds = array<i64: 8, 256>}]} {
    %c0 = arith.constant 0 : index
    %c0_0 = arith.constant 0 : index
    %0 = vector.load %arg1[%c0, %c0_0] : memref<8x128xbf16, #tpu.memory_space<vmem>>, vector<8x128xbf16>
    %c0_1 = arith.constant 0 : index
    %c0_2 = arith.constant 0 : index
    %1 = vector.load %arg3[%c0_1, %c0_2] : memref<128x128xbf16, #tpu.memory_space<vmem>>, vector<128x128xbf16>
    %cst = arith.constant dense<0.000000e+00> : vector<8x128xf32>
    %2 = tpu.matmul %0, %1, %cst {dimension_numbers = #tpu.dot_dimension_numbers<[1], [0], [0], [1], [0, 0, 1, 1], [], []>} : vector<8x128xbf16>, vector<128x128xbf16>, vector<8x128xf32> -> vector<8x128xf32>
    %c0_3 = arith.constant 0 : index
    %c0_4 = arith.constant 0 : index
    %3 = vector.load %arg4[%c0_3, %c0_4] : memref<1x128xf32, #tpu.memory_space<vmem>>, vector<1x128xf32>
    %4 = vector.broadcast %3 : vector<1x128xf32> to vector<8x128xf32>
    %5 = arith.addf %2, %4 : vector<8x128xf32>
    %cst_5 = arith.constant 0.000000e+00 : f32
    %6 = vector.broadcast %cst_5 : f32 to vector<8x128xf32>
    %7 = arith.maximumf %5, %6 : vector<8x128xf32>
    %8 = arith.truncf %7 : vector<8x128xf32> to vector<8x128xbf16>
    %c0_6 = arith.constant 0 : index
    %c0_7 = arith.constant 0 : index
    %9 = vector.load %arg5[%c0_6, %c0_7] : memref<128x256xbf16, #tpu.memory_space<vmem>>, vector<128x256xbf16>
    %cst_8 = arith.constant dense<0.000000e+00> : vector<8x256xf32>
    %10 = tpu.matmul %8, %9, %cst_8 {dimension_numbers = #tpu.dot_dimension_numbers<[1], [0], [0], [1], [0, 0, 1, 1], [], []>} : vector<8x128xbf16>, vector<128x256xbf16>, vector<8x256xf32> -> vector<8x256xf32>
    %c0_9 = arith.constant 0 : index
    %c0_10 = arith.constant 0 : index
    %11 = vector.load %arg6[%c0_9, %c0_10] : memref<1x256xf32, #tpu.memory_space<vmem>>, vector<1x256xf32>
    %12 = vector.broadcast %11 : vector<1x256xf32> to vector<8x256xf32>
    %13 = arith.addf %10, %12 : vector<8x256xf32>
    %c0_11 = arith.constant 0 : index
    %c0_12 = arith.constant 0 : index
    %14 = vector.load %arg12[%c0_11, %c0_12] : memref<8x256xf32, #tpu.memory_space<vmem>>, vector<8x256xf32>
    tpu.vector_store %arg12[%c0_11, %c0_12], %13 {strides = array<i32>} : memref<8x256xf32, #tpu.memory_space<vmem>>, vector<8x256xf32>,
    %15 = vector.extract_strided_slice %13 {offsets = [0, 0], sizes = [8, 128], strides = [1, 1]} : vector<8x256xf32> to vector<8x128xf32>
    %16 = vector.extract_strided_slice %13 {offsets = [0, 128], sizes = [8, 128], strides = [1, 1]} : vector<8x256xf32> to vector<8x128xf32>
    %cst_13 = arith.constant 5.000000e-01 : f32
    %17 = vector.broadcast %cst_13 : f32 to vector<8x128xf32>
    %18 = arith.mulf %17, %16 : vector<8x128xf32>
    %19 = math.exp %18 : vector<8x128xf32>
    %c0_14 = arith.constant 0 : index
    %c0_15 = arith.constant 0 : index
    %20 = vector.load %arg2[%c0_14, %c0_15] : memref<8x128xbf16, #tpu.memory_space<vmem>>, vector<8x128xbf16>
    %21 = arith.extf %20 : vector<8x128xbf16> to vector<8x128xf32>
    %22 = arith.mulf %21, %19 : vector<8x128xf32>
    %23 = arith.addf %22, %15 : vector<8x128xf32>
    %24 = arith.truncf %23 : vector<8x128xf32> to vector<8x128xbf16>
    %c0_16 = arith.constant 0 : index
    %c0_17 = arith.constant 0 : index
    %25 = vector.load %arg7[%c0_16, %c0_17] : memref<128x128xbf16, #tpu.memory_space<vmem>>, vector<128x128xbf16>
    %cst_18 = arith.constant dense<0.000000e+00> : vector<8x128xf32>
    %26 = tpu.matmul %24, %25, %cst_18 {dimension_numbers = #tpu.dot_dimension_numbers<[1], [0], [0], [1], [0, 0, 1, 1], [], []>} : vector<8x128xbf16>, vector<128x128xbf16>, vector<8x128xf32> -> vector<8x128xf32>
    %c0_19 = arith.constant 0 : index
    %c0_20 = arith.constant 0 : index
    %27 = vector.load %arg8[%c0_19, %c0_20] : memref<1x128xf32, #tpu.memory_space<vmem>>, vector<1x128xf32>
    %28 = vector.broadcast %27 : vector<1x128xf32> to vector<8x128xf32>
    %29 = arith.addf %26, %28 : vector<8x128xf32>
    %cst_21 = arith.constant 0.000000e+00 : f32
    %30 = vector.broadcast %cst_21 : f32 to vector<8x128xf32>
    %31 = arith.maximumf %29, %30 : vector<8x128xf32>
    %32 = arith.truncf %31 : vector<8x128xf32> to vector<8x128xbf16>
    %c0_22 = arith.constant 0 : index
    %c0_23 = arith.constant 0 : index
    %33 = vector.load %arg9[%c0_22, %c0_23] : memref<128x128xbf16, #tpu.memory_space<vmem>>, vector<128x128xbf16>
    %cst_24 = arith.constant dense<0.000000e+00> : vector<8x128xf32>
    %34 = tpu.matmul %32, %33, %cst_24 {dimension_numbers = #tpu.dot_dimension_numbers<[1], [0], [0], [1], [0, 0, 1, 1], [], []>} : vector<8x128xbf16>, vector<128x128xbf16>, vector<8x128xf32> -> vector<8x128xf32>
    %c0_25 = arith.constant 0 : index
    %c0_26 = arith.constant 0 : index
    %35 = vector.load %arg10[%c0_25, %c0_26] : memref<1x128xf32, #tpu.memory_space<vmem>>, vector<1x128xf32>
    %36 = vector.broadcast %35 : vector<1x128xf32> to vector<8x128xf32>
    %37 = arith.addf %34, %36 : vector<8x128xf32>
    %38 = math.absf %37 : vector<8x128xf32>
    %cst_27 = arith.constant 0.000000e+00 : f32
    %39 = vector.broadcast %cst_27 : f32 to vector<8x128xf32>
    %40 = arith.subf %39, %38 : vector<8x128xf32>
    %41 = math.exp %40 : vector<8x128xf32>
    %cst_28 = arith.constant 0.000000e+00 : f32
    %42 = vector.broadcast %cst_28 : f32 to vector<8x128xf32>
    %43 = arith.cmpf oge, %37, %42 : vector<8x128xf32>
    %cst_29 = arith.constant 1.000000e+00 : f32
    %44 = vector.broadcast %cst_29 : f32 to vector<8x128xf32>
    %45 = arith.select %43, %44, %41 : vector<8x128xi1>, vector<8x128xf32>
    %cst_30 = arith.constant 1.000000e+00 : f32
    %46 = vector.broadcast %cst_30 : f32 to vector<8x128xf32>
    %47 = arith.addf %46, %41 : vector<8x128xf32>
    %48 = tpu.reciprocal %47 {approx = true} : vector<8x128xf32> -> vector<8x128xf32>
    %49 = arith.mulf %45, %48 : vector<8x128xf32>
    %cst_31 = arith.constant 0.000000e+00 : f32
    %cst_32 = arith.constant 1.000000e+00 : f32
    %50 = vector.broadcast %cst_31 : f32 to vector<8x128xf32>
    %51 = arith.maximumf %50, %49 : vector<8x128xf32>
    %52 = vector.broadcast %cst_32 : f32 to vector<8x128xf32>
    %53 = arith.minimumf %52, %51 : vector<8x128xf32>
    %54 = arith.truncf %53 : vector<8x128xf32> to vector<8x128xbf16>
    %c0_33 = arith.constant 0 : index
    %c0_34 = arith.constant 0 : index
    %55 = vector.load %arg11[%c0_33, %c0_34] : memref<8x128xbf16, #tpu.memory_space<vmem>>, vector<8x128xbf16>
    tpu.vector_store %arg11[%c0_33, %c0_34], %54 {strides = array<i32>} : memref<8x128xbf16, #tpu.memory_space<vmem>>, vector<8x128xbf16>,
    return
  }
  func.func @transform_0(%arg0: i32) -> (i32, i32) {
    %c0_i32 = arith.constant 0 : i32
    %c0_i32_0 = arith.constant 0 : i32
    return %arg0, %c0_i32 : i32, i32
  }
  func.func @transform_1(%arg0: i32) -> (i32, i32) {
    %c0_i32 = arith.constant 0 : i32
    %c0_i32_0 = arith.constant 0 : i32
    return %arg0, %c0_i32 : i32, i32
  }
  func.func @transform_2(%arg0: i32) -> (i32, i32) {
    %c0_i32 = arith.constant 0 : i32
    %c0_i32_0 = arith.constant 0 : i32
    %c0_i32_1 = arith.constant 0 : i32
    return %c0_i32, %c0_i32_0 : i32, i32
  }
  func.func @transform_3(%arg0: i32) -> (i32, i32) {
    %c0_i32 = arith.constant 0 : i32
    %c0_i32_0 = arith.constant 0 : i32
    %c0_i32_1 = arith.constant 0 : i32
    return %c0_i32, %c0_i32_0 : i32, i32
  }
  func.func @transform_4(%arg0: i32) -> (i32, i32) {
    %c0_i32 = arith.constant 0 : i32
    %c0_i32_0 = arith.constant 0 : i32
    %c0_i32_1 = arith.constant 0 : i32
    return %c0_i32, %c0_i32_0 : i32, i32
  }
  func.func @transform_5(%arg0: i32) -> (i32, i32) {
    %c0_i32 = arith.constant 0 : i32
    %c0_i32_0 = arith.constant 0 : i32
    %c0_i32_1 = arith.constant 0 : i32
    return %c0_i32, %c0_i32_0 : i32, i32
  }
  func.func @transform_6(%arg0: i32) -> (i32, i32) {
    %c0_i32 = arith.constant 0 : i32
    %c0_i32_0 = arith.constant 0 : i32
    %c0_i32_1 = arith.constant 0 : i32
    return %c0_i32, %c0_i32_0 : i32, i32
  }
  func.func @transform_7(%arg0: i32) -> (i32, i32) {
    %c0_i32 = arith.constant 0 : i32
    %c0_i32_0 = arith.constant 0 : i32
    %c0_i32_1 = arith.constant 0 : i32
    return %c0_i32, %c0_i32_0 : i32, i32
  }
  func.func @transform_8(%arg0: i32) -> (i32, i32) {
    %c0_i32 = arith.constant 0 : i32
    %c0_i32_0 = arith.constant 0 : i32
    %c0_i32_1 = arith.constant 0 : i32
    return %c0_i32, %c0_i32_0 : i32, i32
  }
  func.func @transform_9(%arg0: i32) -> (i32, i32) {
    %c0_i32 = arith.constant 0 : i32
    %c0_i32_0 = arith.constant 0 : i32
    %c0_i32_1 = arith.constant 0 : i32
    return %c0_i32, %c0_i32_0 : i32, i32
  }
  func.func @transform_10(%arg0: i32) -> (i32, i32) {
    %c0_i32 = arith.constant 0 : i32
    %c0_i32_0 = arith.constant 0 : i32
    return %arg0, %c0_i32 : i32, i32
  }
  func.func @transform_11(%arg0: i32) -> (i32, i32) {
    %c0_i32 = arith.constant 0 : i32
    %c0_i32_0 = arith.constant 0 : i32
    return %arg0, %c0_i32 : i32, i32
  }
}

</mosaic_0001>

<llo_original>
// kernel: tpu_custom_call.1
$region0: #{tpu_custom_call.1}
  #allocation0 [shape = 'u32[]', space=smem, size = 0x4, offset = 0x4, fixed_abs, tag = 'smem constant byte address 0x4 - core index']
  #allocation1 [shape = 'u32[144,128]{1,0:T(1,128)}', space=vmem, size = 0x12000, scoped, tag = 'internal scratch']
  %s0 = inlined_call_operand.hbm [shape: bf16[8,128], index: 0, kind: input, shape index: {}]
  %s1 = inlined_call_operand.hbm [shape: bf16[8,128], index: 1, kind: input, shape index: {}]
  %s2 = inlined_call_operand.hbm [shape: bf16[128,128], index: 2, kind: input, shape index: {}]
  %s3 = inlined_call_operand.vmem [shape: f32[1,128], index: 3, kind: input, shape index: {}]
  %s4 = inlined_call_operand.hbm [shape: bf16[128,256], index: 4, kind: input, shape index: {}]
  %s5 = inlined_call_operand.vmem [shape: f32[1,256], index: 5, kind: input, shape index: {}]
  %s6 = inlined_call_operand.hbm [shape: bf16[128,128], index: 6, kind: input, shape index: {}]
  %s7 = inlined_call_operand.vmem [shape: f32[1,128], index: 7, kind: input, shape index: {}]
  %s8 = inlined_call_operand.hbm [shape: bf16[128,128], index: 8, kind: input, shape index: {}]
  %s9 = inlined_call_operand.vmem [shape: f32[1,128], index: 9, kind: input, shape index: {}]
  %s10 = inlined_call_operand.hbm [shape: bf16[8,128], index: 10, kind: output, shape index: {0}]
  %s11 = inlined_call_operand.hbm [shape: f32[8,256], index: 11, kind: output, shape index: {1}]
  %12 = xla_tuple %s10, %s11
  %s13 = sld [smem:[#allocation0]]
  $region82: #{tpu_custom_call.1} parent=0
    _
  %s15 = ssub.s32 1, %s13
  %s16 = scalar_select 0, %s15, %s13
  $region1: #{tpu_custom_call.1} parent=0
    #allocation2 [shape = 'u8[2048]{0}', space=vmem, size = 0x800, scoped, tag = 'input window, operand 0, single buffered']
    #allocation3 [shape = 's32[1]{0}', space=sflag, size = 0x4, scoped, tag = 'scoped memory for tpu_custom_call.1']
    #allocation4 [shape = 's32[1]{0}', space=sflag, size = 0x4, scoped, tag = 'scoped memory for tpu_custom_call.1']
    #allocation5 [shape = 'u8[2048]{0}', space=vmem, size = 0x800, scoped, tag = 'input window, operand 1, single buffered']
    #allocation6 [shape = 's32[1]{0}', space=sflag, size = 0x4, scoped, tag = 'scoped memory for tpu_custom_call.1']
    #allocation7 [shape = 'u8[32768]{0}', space=vmem, size = 0x8000, scoped, tag = 'input window, operand 2, single buffered']
    #allocation8 [shape = 'u8[65536]{0}', space=vmem, size = 0x10000, scoped, tag = 'input window, operand 4, single buffered']
    #allocation9 [shape = 's32[1]{0}', space=sflag, size = 0x4, scoped, tag = 'scoped memory for tpu_custom_call.1']
    #allocation10 [shape = 'u8[32768]{0}', space=vmem, size = 0x8000, scoped, tag = 'input window, operand 6, single buffered']
    #allocation11 [shape = 'u8[32768]{0}', space=vmem, size = 0x8000, scoped, tag = 'input window, operand 8, single buffered']
    #allocation12 [shape = 's32[1]{0}', space=sflag, size = 0x4, scoped, tag = 'scoped memory for tpu_custom_call.1']
    #allocation13 [shape = 'u8[2048]{0}', space=vmem, size = 0x800, scoped, tag = 'output window, operand 0, single buffered']
    #allocation14 [shape = 'u8[8192]{0}', space=vmem, size = 0x2000, scoped, tag = 'output window, operand 1, single buffered']
    #allocation15 [shape = 's32[1]{0}', space=sflag, size = 0x4, scoped, tag = 'scoped memory for tpu_custom_call.1']
    %17 = vsyncpa [#allocation3], 0
    %18 = vsyncpa [#allocation6], 0
    %19 = vsyncpa [#allocation9], 0
    %20 = vsyncpa [#allocation12], 0
    %21 = vsyncpa [#allocation4], 0
    %22 = vsyncpa [#allocation15], 0
    // Predicated region
    $region2: #{tpu_custom_call.1} parent=1 // pred_check
      _
    $region3: #{tpu_custom_call.1} parent=1 // pred_check_branch
      %24 = sbr.rel (0) target = $region5
    $region4: #{tpu_custom_call.1} parent=1 // pred_region
      %s26 = ssub.s32 64, 64
      %27 = vsyncadd [#allocation3], %s26
      %s29 = sshll.u32 [#allocation2], 4
      %s30 = int_to_ptr.vmem [resolvable:$true] %s29
      %32 = dma.hbm_to_vmem [thread:$0]  %s0, 64, %s30, [#allocation3]
    $region5: #{tpu_custom_call.1} parent=1 // pred_fallthru
      _
    // Predicated region
    $region6: #{tpu_custom_call.1} parent=1 // pred_check
      _
    $region7: #{tpu_custom_call.1} parent=1 // pred_check_branch
      %34 = sbr.rel (0) target = $region9
    $region8: #{tpu_custom_call.1} parent=1 // pred_region
      %s36 = ssub.s32 64, 64
      %37 = vsyncadd [#allocation6], %s36
      %s39 = sshll.u32 [#allocation5], 4
      %s40 = int_to_ptr.vmem [resolvable:$true] %s39
      %42 = dma.hbm_to_vmem [thread:$0]  %s1, 64, %s40, [#allocation6]
    $region9: #{tpu_custom_call.1} parent=1 // pred_fallthru
      _
    // Predicated region
    $region10: #{tpu_custom_call.1} parent=1 // pred_check
      _
    $region11: #{tpu_custom_call.1} parent=1 // pred_check_branch
      %44 = sbr.rel (0) target = $region13
    $region12: #{tpu_custom_call.1} parent=1 // pred_region
      %s46 = ssub.s32 1024, 1024
      %47 = vsyncadd [#allocation6], %s46
      %s48 = sshll.u32 [#allocation7], 4
      %s49 = int_to_ptr.vmem [resolvable:$true] %s48
      %54 = dma.hbm_to_vmem [thread:$0]  %s2, 1024, %s49, [#allocation6], 64, 64, 4
    $region13: #{tpu_custom_call.1} parent=1 // pred_fallthru
      _
    // Predicated region
    $region14: #{tpu_custom_call.1} parent=1 // pred_check
      _
    $region15: #{tpu_custom_call.1} parent=1 // pred_check_branch
      %56 = sbr.rel (0) target = $region17
    $region16: #{tpu_custom_call.1} parent=1 // pred_region
      _
    $region17: #{tpu_custom_call.1} parent=1 // pred_fallthru
      _
    // Predicated region
    $region18: #{tpu_custom_call.1} parent=1 // pred_check
      _
    $region19: #{tpu_custom_call.1} parent=1 // pred_check_branch
      %58 = sbr.rel (0) target = $region21
    $region20: #{tpu_custom_call.1} parent=1 // pred_region
      %s60 = ssub.s32 2048, 2048
      %61 = vsyncadd [#allocation9], %s60
      %s62 = sshll.u32 [#allocation8], 4
      %s63 = int_to_ptr.vmem [resolvable:$true] %s62
      %68 = dma.hbm_to_vmem [thread:$0]  %s4, 2048, %s63, [#allocation9], 128, 128, 8
    $region21: #{tpu_custom_call.1} parent=1 // pred_fallthru
      _
    // Predicated region
    $region22: #{tpu_custom_call.1} parent=1 // pred_check
      _
    $region23: #{tpu_custom_call.1} parent=1 // pred_check_branch
      %70 = sbr.rel (0) target = $region25
    $region24: #{tpu_custom_call.1} parent=1 // pred_region
      _
    $region25: #{tpu_custom_call.1} parent=1 // pred_fallthru
      _
    // Predicated region
    $region26: #{tpu_custom_call.1} parent=1 // pred_check
      _
    $region27: #{tpu_custom_call.1} parent=1 // pred_check_branch
      %72 = sbr.rel (0) target = $region29
    $region28: #{tpu_custom_call.1} parent=1 // pred_region
      %s74 = ssub.s32 1024, 1024
      %75 = vsyncadd [#allocation9], %s74
      %s76 = sshll.u32 [#allocation10], 4
      %s77 = int_to_ptr.vmem [resolvable:$true] %s76
      %82 = dma.hbm_to_vmem [thread:$0]  %s6, 1024, %s77, [#allocation9], 64, 64, 4
    $region29: #{tpu_custom_call.1} parent=1 // pred_fallthru
      _
    // Predicated region
    $region30: #{tpu_custom_call.1} parent=1 // pred_check
      _
    $region31: #{tpu_custom_call.1} parent=1 // pred_check_branch
      %84 = sbr.rel (0) target = $region33
    $region32: #{tpu_custom_call.1} parent=1 // pred_region
      _
    $region33: #{tpu_custom_call.1} parent=1 // pred_fallthru
      _
    // Predicated region
    $region34: #{tpu_custom_call.1} parent=1 // pred_check
      _
    $region35: #{tpu_custom_call.1} parent=1 // pred_check_branch
      %86 = sbr.rel (0) target = $region37
    $region36: #{tpu_custom_call.1} parent=1 // pred_region
      %s88 = ssub.s32 1024, 1024
      %89 = vsyncadd [#allocation12], %s88
      %s90 = sshll.u32 [#allocation11], 4
      %s91 = int_to_ptr.vmem [resolvable:$true] %s90
      %96 = dma.hbm_to_vmem [thread:$0]  %s8, 1024, %s91, [#allocation12], 64, 64, 4
    $region37: #{tpu_custom_call.1} parent=1 // pred_fallthru
      _
    // Predicated region
    $region38: #{tpu_custom_call.1} parent=1 // pred_check
      _
    $region39: #{tpu_custom_call.1} parent=1 // pred_check_branch
      %98 = sbr.rel (0) target = $region41
    $region40: #{tpu_custom_call.1} parent=1 // pred_region
      _
    $region41: #{tpu_custom_call.1} parent=1 // pred_fallthru
      _
    // Predicated region
    $region42: #{tpu_custom_call.1} parent=1 // pred_check
      _
    $region43: #{tpu_custom_call.1} parent=1 // pred_check_branch
      %100 = sbr.rel (0) target = $region45
    $region44: #{tpu_custom_call.1} parent=1 // pred_region
      %101 = dma.done [#allocation3], 64
    $region45: #{tpu_custom_call.1} parent=1 // pred_fallthru
      _
    // Predicated region
    $region46: #{tpu_custom_call.1} parent=1 // pred_check
      _
    $region47: #{tpu_custom_call.1} parent=1 // pred_check_branch
      %103 = sbr.rel (0) target = $region49
    $region48: #{tpu_custom_call.1} parent=1 // pred_region
      %104 = dma.done [#allocation6], 64
    $region49: #{tpu_custom_call.1} parent=1 // pred_fallthru
      _
    // Predicated region
    $region50: #{tpu_custom_call.1} parent=1 // pred_check
      _
    $region51: #{tpu_custom_call.1} parent=1 // pred_check_branch
      %106 = sbr.rel (0) target = $region53
    $region52: #{tpu_custom_call.1} parent=1 // pred_region
      %107 = dma.done [#allocation6], 1024
    $region53: #{tpu_custom_call.1} parent=1 // pred_fallthru
      _
    // Predicated region
    $region54: #{tpu_custom_call.1} parent=1 // pred_check
      _
    $region55: #{tpu_custom_call.1} parent=1 // pred_check_branch
      %109 = sbr.rel (0) target = $region57
    $region56: #{tpu_custom_call.1} parent=1 // pred_region
      %110 = dma.done [#allocation9], 2048
    $region57: #{tpu_custom_call.1} parent=1 // pred_fallthru
      _
    // Predicated region
    $region58: #{tpu_custom_call.1} parent=1 // pred_check
      _
    $region59: #{tpu_custom_call.1} parent=1 // pred_check_branch
      %112 = sbr.rel (0) target = $region61
    $region60: #{tpu_custom_call.1} parent=1 // pred_region
      %113 = dma.done [#allocation9], 1024
    $region61: #{tpu_custom_call.1} parent=1 // pred_fallthru
      _
    // Predicated region
    $region62: #{tpu_custom_call.1} parent=1 // pred_check
      _
    $region63: #{tpu_custom_call.1} parent=1 // pred_check_branch
      %115 = sbr.rel (0) target = $region65
    $region64: #{tpu_custom_call.1} parent=1 // pred_region
      %116 = dma.done [#allocation12], 1024
    $region65: #{tpu_custom_call.1} parent=1 // pred_fallthru
      _
    %v118 = vld [vmem:[#allocation2] sm:$0xf]
    %v119 = vld [vmem:[#allocation7] sm:$0xf]
    %v120 = vld [vmem:[#allocation7 + $0x4] sm:$0xf]
    %v121 = vld [vmem:[#allocation7 + $0x8] sm:$0xf]
    %v122 = vld [vmem:[#allocation7 + $0xc] sm:$0xf]
    %v123 = vld [vmem:[#allocation7 + $0x10] sm:$0xf]
    %v124 = vld [vmem:[#allocation7 + $0x14] sm:$0xf]
    %v125 = vld [vmem:[#allocation7 + $0x18] sm:$0xf]
    %v126 = vld [vmem:[#allocation7 + $0x1c] sm:$0xf]
    %v127 = vld [vmem:[#allocation7 + $0x20] sm:$0xf]
    %v128 = vld [vmem:[#allocation7 + $0x24] sm:$0xf]
    %v129 = vld [vmem:[#allocation7 + $0x28] sm:$0xf]
    %v130 = vld [vmem:[#allocation7 + $0x2c] sm:$0xf]
    %v131 = vld [vmem:[#allocation7 + $0x30] sm:$0xf]
    %v132 = vld [vmem:[#allocation7 + $0x34] sm:$0xf]
    %v133 = vld [vmem:[#allocation7 + $0x38] sm:$0xf]
    %v134 = vld [vmem:[#allocation7 + $0x3c] sm:$0xf]
    %v135 = vld [vmem:[%s3] sm:$0x1]
    %v137 = vlaneseq
    %v138 = vshrl.u32 %v137, 7
    %v139 = vsub.s32 0, %v138
    %v140 = vrot.slane %v135, %v139
    %v158 = vunpack.c.l.b16 %v119
    %v159 = vunpack.c.l.b16 %v120
    %v160 = vunpack.c.l.b16 %v121
    %v161 = vunpack.c.l.b16 %v122
    %v162 = vunpack.c.l.b16 %v123
    %v163 = vunpack.c.l.b16 %v124
    %v164 = vunpack.c.l.b16 %v125
    %v165 = vunpack.c.l.b16 %v126
    %v166 = vunpack.c.l.b16 %v127
    %v167 = vunpack.c.l.b16 %v128
    %v168 = vunpack.c.l.b16 %v129
    %v169 = vunpack.c.l.b16 %v130
    %v170 = vunpack.c.l.b16 %v131
    %v171 = vunpack.c.l.b16 %v132
    %v172 = vunpack.c.l.b16 %v133
    %v173 = vunpack.c.l.b16 %v134
    %v174 = vpack.c.b16 %v159, %v158
    %v175 = vpack.c.b16 %v161, %v160
    %v176 = vpack.c.b16 %v163, %v162
    %v177 = vpack.c.b16 %v165, %v164
    %v178 = vpack.c.b16 %v167, %v166
    %v179 = vpack.c.b16 %v169, %v168
    %v180 = vpack.c.b16 %v171, %v170
    %v181 = vpack.c.b16 %v173, %v172
    %190 = vmatprep.subr.bf16.mxu0 0
    %191 = vmatpush1.bf16.msra.mxu0 %v174
    %192 = vmatprep.subr.bf16.mxu0 0
    %193 = vmatpush1.bf16.msra.mxu0 %v175
    %194 = vmatprep.subr.bf16.mxu0 0
    %195 = vmatpush1.bf16.msra.mxu0 %v176
    %196 = vmatprep.subr.bf16.mxu0 0
    %197 = vmatpush1.bf16.msra.mxu0 %v177
    %198 = vmatprep.subr.bf16.mxu0 0
    %199 = vmatpush1.bf16.msra.mxu0 %v178
    %200 = vmatprep.subr.bf16.mxu0 0
    %201 = vmatpush1.bf16.msra.mxu0 %v179
    %202 = vmatprep.subr.bf16.mxu0 0
    %203 = vmatpush1.bf16.msra.mxu0 %v180
    %204 = vmatprep.subr.bf16.mxu0 0
    %205 = vmatpush1.bf16.msra.mxu0 %v181
    %206 = vmatprep.subr.bf16.mxu0 0
    %207 = vmatpush1.bf16.msra.mxu0 0
    %208 = vmatprep.subr.bf16.mxu0 0
    %209 = vmatpush1.bf16.msra.mxu0 0
    %210 = vmatprep.subr.bf16.mxu0 0
    %211 = vmatpush1.bf16.msra.mxu0 0
    %212 = vmatprep.subr.bf16.mxu0 0
    %213 = vmatpush1.bf16.msra.mxu0 0
    %214 = vmatprep.subr.bf16.mxu0 0
    %215 = vmatpush1.bf16.msra.mxu0 0
    %216 = vmatprep.subr.bf16.mxu0 0
    %217 = vmatpush1.bf16.msra.mxu0 0
    %218 = vmatprep.subr.bf16.mxu0 0
    %219 = vmatpush1.bf16.msra.mxu0 0
    %220 = vmatprep.subr.bf16.mxu0 0
    %221 = vmatpush1.bf16.msra.mxu0 0
    %222 = vmatprep.mubr.bf16.mxu0 0
    %223 = vmatmul.mubr.bf16.gmra.mrb[0].mxu0 %v118
    %v224 = vpop.f32.mrb[0].mxu0
    %v225 = vadd.f32 %v140, %v224
    %v226 = vpop.f32.mrb[0].mxu0
    %v227 = vpop.f32.mrb[0].mxu0
    %v228 = vpop.f32.mrb[0].mxu0
    %229 = vdwg.mxu0
    %v230 = vmax.f32 %v225, 0.0
    %v231 = vpack.c.bf16 %v230, %v230
    %v232 = vld [vmem:[#allocation8] sm:$0xff]
    %v233 = vld [vmem:[#allocation8 + $0x8] sm:$0xff]
    %v234 = vld [vmem:[#allocation8 + $0x10] sm:$0xff]
    %v235 = vld [vmem:[#allocation8 + $0x18] sm:$0xff]
    %v236 = vld [vmem:[#allocation8 + $0x20] sm:$0xff]
    %v237 = vld [vmem:[#allocation8 + $0x28] sm:$0xff]
    %v238 = vld [vmem:[#allocation8 + $0x30] sm:$0xff]
    %v239 = vld [vmem:[#allocation8 + $0x38] sm:$0xff]
    %v240 = vld [vmem:[#allocation8 + $0x40] sm:$0xff]
    %v241 = vld [vmem:[#allocation8 + $0x48] sm:$0xff]
    %v242 = vld [vmem:[#allocation8 + $0x50] sm:$0xff]
    %v243 = vld [vmem:[#allocation8 + $0x58] sm:$0xff]
    %v244 = vld [vmem:[#allocation8 + $0x60] sm:$0xff]
    %v245 = vld [vmem:[#allocation8 + $0x68] sm:$0xff]
    %v246 = vld [vmem:[#allocation8 + $0x70] sm:$0xff]
    %v247 = vld [vmem:[#allocation8 + $0x78] sm:$0xff]
    %v248 = vld [vmem:[%s5] sm:$0x3]
    %v250 = vlaneseq
    %v251 = vshrl.u32 %v250, 7
    %v252 = vsub.s32 0, %v251
    %v253 = vrot.slane %v248, %v252
    %v254 = vlaneseq
    %v255 = vshrl.u32 %v254, 7
    %v256 = vsub.s32 1, %v255
    %v257 = vrot.slane %v248, %v256
    %v276 = vunpack.c.l.b16 %v232
    %v277 = vunpack.c.h.b16 %v232
    %v278 = vunpack.c.l.b16 %v233
    %v279 = vunpack.c.h.b16 %v233
    %v280 = vunpack.c.l.b16 %v234
    %v281 = vunpack.c.h.b16 %v234
    %v282 = vunpack.c.l.b16 %v235
    %v283 = vunpack.c.h.b16 %v235
    %v284 = vunpack.c.l.b16 %v236
    %v285 = vunpack.c.h.b16 %v236
    %v286 = vunpack.c.l.b16 %v237
    %v287 = vunpack.c.h.b16 %v237
    %v288 = vunpack.c.l.b16 %v238
    %v289 = vunpack.c.h.b16 %v238
    %v290 = vunpack.c.l.b16 %v239
    %v291 = vunpack.c.h.b16 %v239
    %v292 = vunpack.c.l.b16 %v240
    %v293 = vunpack.c.h.b16 %v240
    %v294 = vunpack.c.l.b16 %v241
    %v295 = vunpack.c.h.b16 %v241
    %v296 = vunpack.c.l.b16 %v242
    %v297 = vunpack.c.h.b16 %v242
    %v298 = vunpack.c.l.b16 %v243
    %v299 = vunpack.c.h.b16 %v243
    %v300 = vunpack.c.l.b16 %v244
    %v301 = vunpack.c.h.b16 %v244
    %v302 = vunpack.c.l.b16 %v245
    %v303 = vunpack.c.h.b16 %v245
    %v304 = vunpack.c.l.b16 %v246
    %v305 = vunpack.c.h.b16 %v246
    %v306 = vunpack.c.l.b16 %v247
    %v307 = vunpack.c.h.b16 %v247
    %v308 = vpack.c.b16 %v278, %v276
    %v309 = vpack.c.b16 %v279, %v277
    %v310 = vpack.c.b16 %v282, %v280
    %v311 = vpack.c.b16 %v283, %v281
    %v312 = vpack.c.b16 %v286, %v284
    %v313 = vpack.c.b16 %v287, %v285
    %v314 = vpack.c.b16 %v290, %v288
    %v315 = vpack.c.b16 %v291, %v289
    %v316 = vpack.c.b16 %v294, %v292
    %v317 = vpack.c.b16 %v295, %v293
    %v318 = vpack.c.b16 %v298, %v296
    %v319 = vpack.c.b16 %v299, %v297
    %v320 = vpack.c.b16 %v302, %v300
    %v321 = vpack.c.b16 %v303, %v301
    %v322 = vpack.c.b16 %v306, %v304
    %v323 = vpack.c.b16 %v307, %v305
    %340 = vmatprep.subr.bf16.mxu0 %v309
    %341 = vmatpush1.bf16.msra.mxu0 %v308
    %342 = vmatprep.subr.bf16.mxu0 %v311
    %343 = vmatpush1.bf16.msra.mxu0 %v310
    %344 = vmatprep.subr.bf16.mxu0 %v313
    %345 = vmatpush1.bf16.msra.mxu0 %v312
    %346 = vmatprep.subr.bf16.mxu0 %v315
    %347 = vmatpush1.bf16.msra.mxu0 %v314
    %348 = vmatprep.subr.bf16.mxu0 %v317
    %349 = vmatpush1.bf16.msra.mxu0 %v316
    %350 = vmatprep.subr.bf16.mxu0 %v319
    %351 = vmatpush1.bf16.msra.mxu0 %v318
    %352 = vmatprep.subr.bf16.mxu0 %v321
    %353 = vmatpush1.bf16.msra.mxu0 %v320
    %354 = vmatprep.subr.bf16.mxu0 %v323
    %355 = vmatpush1.bf16.msra.mxu0 %v322
    %356 = vmatprep.subr.bf16.mxu0 0
    %357 = vmatpush1.bf16.msra.mxu0 0
    %358 = vmatprep.subr.bf16.mxu0 0
    %359 = vmatpush1.bf16.msra.mxu0 0
    %360 = vmatprep.subr.bf16.mxu0 0
    %361 = vmatpush1.bf16.msra.mxu0 0
    %362 = vmatprep.subr.bf16.mxu0 0
    %363 = vmatpush1.bf16.msra.mxu0 0
    %364 = vmatprep.subr.bf16.mxu0 0
    %365 = vmatpush1.bf16.msra.mxu0 0
    %366 = vmatprep.subr.bf16.mxu0 0
    %367 = vmatpush1.bf16.msra.mxu0 0
    %368 = vmatprep.subr.bf16.mxu0 0
    %369 = vmatpush1.bf16.msra.mxu0 0
    %370 = vmatprep.subr.bf16.mxu0 0
    %371 = vmatpush1.bf16.msra.mxu0 0
    %372 = vmatprep.mubr.bf16.mxu0 0
    %373 = vmatmul.mubr.bf16.gmra.mrb[0].mxu0 %v231
    %v374 = vpop.f32.mrb[0].mxu0
    %v375 = vadd.f32 %v253, %v374
    %v376 = vpop.f32.mrb[0].mxu0
    %v377 = vadd.f32 %v257, %v376
    %v378 = vpop.f32.mrb[0].mxu0
    %v379 = vpop.f32.mrb[0].mxu0
    %380 = vdwg.mxu0
    %381 = vst [vmem:[#allocation14] sm:$0xff] %v375
    %382 = vst [vmem:[#allocation14 + $0x8] sm:$0xff] %v377
    %v383 = vmul.f32 %v377, 0.5
    %v384 = vmul.f32 %v383, 1.442695
    %v385 = vpow.pop %v384
    %v386 = vld [vmem:[#allocation5] sm:$0xf]
    %v387 = vunpack.c.l.bf16 %v386
    %v388 = vmul.f32 %v387, %v385
    %v389 = vadd.f32 %v388, %v375
    %v390 = vpack.c.bf16 %v389, %v389
    %v391 = vld [vmem:[#allocation10] sm:$0xf]
    %v392 = vld [vmem:[#allocation10 + $0x4] sm:$0xf]
    %v393 = vld [vmem:[#allocation10 + $0x8] sm:$0xf]
    %v394 = vld [vmem:[#allocation10 + $0xc] sm:$0xf]
    %v395 = vld [vmem:[#allocation10 + $0x10] sm:$0xf]
    %v396 = vld [vmem:[#allocation10 + $0x14] sm:$0xf]
    %v397 = vld [vmem:[#allocation10 + $0x18] sm:$0xf]
    %v398 = vld [vmem:[#allocation10 + $0x1c] sm:$0xf]
    %v399 = vld [vmem:[#allocation10 + $0x20] sm:$0xf]
    %v400 = vld [vmem:[#allocation10 + $0x24] sm:$0xf]
    %v401 = vld [vmem:[#allocation10 + $0x28] sm:$0xf]
    %v402 = vld [vmem:[#allocation10 + $0x2c] sm:$0xf]
    %v403 = vld [vmem:[#allocation10 + $0x30] sm:$0xf]
    %v404 = vld [vmem:[#allocation10 + $0x34] sm:$0xf]
    %v405 = vld [vmem:[#allocation10 + $0x38] sm:$0xf]
    %v406 = vld [vmem:[#allocation10 + $0x3c] sm:$0xf]
    %v407 = vld [vmem:[%s7] sm:$0x1]
    %v409 = vlaneseq
    %v410 = vshrl.u32 %v409, 7
    %v411 = vsub.s32 0, %v410
    %v412 = vrot.slane %v407, %v411
    %v430 = vunpack.c.l.b16 %v391
    %v431 = vunpack.c.l.b16 %v392
    %v432 = vunpack.c.l.b16 %v393
    %v433 = vunpack.c.l.b16 %v394
    %v434 = vunpack.c.l.b16 %v395
    %v435 = vunpack.c.l.b16 %v396
    %v436 = vunpack.c.l.b16 %v397
    %v437 = vunpack.c.l.b16 %v398
    %v438 = vunpack.c.l.b16 %v399
    %v439 = vunpack.c.l.b16 %v400
    %v440 = vunpack.c.l.b16 %v401
    %v441 = vunpack.c.l.b16 %v402
    %v442 = vunpack.c.l.b16 %v403
    %v443 = vunpack.c.l.b16 %v404
    %v444 = vunpack.c.l.b16 %v405
    %v445 = vunpack.c.l.b16 %v406
    %v446 = vpack.c.b16 %v431, %v430
    %v447 = vpack.c.b16 %v433, %v432
    %v448 = vpack.c.b16 %v435, %v434
    %v449 = vpack.c.b16 %v437, %v436
    %v450 = vpack.c.b16 %v439, %v438
    %v451 = vpack.c.b16 %v441, %v440
    %v452 = vpack.c.b16 %v443, %v442
    %v453 = vpack.c.b16 %v445, %v444
    %462 = vmatprep.subr.bf16.mxu0 0
    %463 = vmatpush1.bf16.msra.mxu0 %v446
    %464 = vmatprep.subr.bf16.mxu0 0
    %465 = vmatpush1.bf16.msra.mxu0 %v447
    %466 = vmatprep.subr.bf16.mxu0 0
    %467 = vmatpush1.bf16.msra.mxu0 %v448
    %468 = vmatprep.subr.bf16.mxu0 0
    %469 = vmatpush1.bf16.msra.mxu0 %v449
    %470 = vmatprep.subr.bf16.mxu0 0
    %471 = vmatpush1.bf16.msra.mxu0 %v450
    %472 = vmatprep.subr.bf16.mxu0 0
    %473 = vmatpush1.bf16.msra.mxu0 %v451
    %474 = vmatprep.subr.bf16.mxu0 0
    %475 = vmatpush1.bf16.msra.mxu0 %v452
    %476 = vmatprep.subr.bf16.mxu0 0
    %477 = vmatpush1.bf16.msra.mxu0 %v453
    %478 = vmatprep.subr.bf16.mxu0 0
    %479 = vmatpush1.bf16.msra.mxu0 0
    %480 = vmatprep.subr.bf16.mxu0 0
    %481 = vmatpush1.bf16.msra.mxu0 0
    %482 = vmatprep.subr.bf16.mxu0 0
    %483 = vmatpush1.bf16.msra.mxu0 0
    %484 = vmatprep.subr.bf16.mxu0 0
    %485 = vmatpush1.bf16.msra.mxu0 0
    %486 = vmatprep.subr.bf16.mxu0 0
    %487 = vmatpush1.bf16.msra.mxu0 0
    %488 = vmatprep.subr.bf16.mxu0 0
    %489 = vmatpush1.bf16.msra.mxu0 0
    %490 = vmatprep.subr.bf16.mxu0 0
    %491 = vmatpush1.bf16.msra.mxu0 0
    %492 = vmatprep.subr.bf16.mxu0 0
    %493 = vmatpush1.bf16.msra.mxu0 0
    %494 = vmatprep.mubr.bf16.mxu0 0
    %495 = vmatmul.mubr.bf16.gmra.mrb[0].mxu0 %v390
    %v496 = vpop.f32.mrb[0].mxu0
    %v497 = vadd.f32 %v412, %v496
    %v498 = vpop.f32.mrb[0].mxu0
    %v499 = vpop.f32.mrb[0].mxu0
    %v500 = vpop.f32.mrb[0].mxu0
    %501 = vdwg.mxu0
    %v502 = vmax.f32 %v497, 0.0
    %v503 = vpack.c.bf16 %v502, %v502
    %v504 = vld [vmem:[#allocation11] sm:$0xf]
    %v505 = vld [vmem:[#allocation11 + $0x4] sm:$0xf]
    %v506 = vld [vmem:[#allocation11 + $0x8] sm:$0xf]
    %v507 = vld [vmem:[#allocation11 + $0xc] sm:$0xf]
    %v508 = vld [vmem:[#allocation11 + $0x10] sm:$0xf]
    %v509 = vld [vmem:[#allocation11 + $0x14] sm:$0xf]
    %v510 = vld [vmem:[#allocation11 + $0x18] sm:$0xf]
    %v511 = vld [vmem:[#allocation11 + $0x1c] sm:$0xf]
    %v512 = vld [vmem:[#allocation11 + $0x20] sm:$0xf]
    %v513 = vld [vmem:[#allocation11 + $0x24] sm:$0xf]
    %v514 = vld [vmem:[#allocation11 + $0x28] sm:$0xf]
    %v515 = vld [vmem:[#allocation11 + $0x2c] sm:$0xf]
    %v516 = vld [vmem:[#allocation11 + $0x30] sm:$0xf]
    %v517 = vld [vmem:[#allocation11 + $0x34] sm:$0xf]
    %v518 = vld [vmem:[#allocation11 + $0x38] sm:$0xf]
    %v519 = vld [vmem:[#allocation11 + $0x3c] sm:$0xf]
    %v520 = vld [vmem:[%s9] sm:$0x1]
    %v522 = vlaneseq
    %v523 = vshrl.u32 %v522, 7
    %v524 = vsub.s32 0, %v523
    %v525 = vrot.slane %v520, %v524
    %v543 = vunpack.c.l.b16 %v504
    %v544 = vunpack.c.l.b16 %v505
    %v545 = vunpack.c.l.b16 %v506
    %v546 = vunpack.c.l.b16 %v507
    %v547 = vunpack.c.l.b16 %v508
    %v548 = vunpack.c.l.b16 %v509
    %v549 = vunpack.c.l.b16 %v510
    %v550 = vunpack.c.l.b16 %v511
    %v551 = vunpack.c.l.b16 %v512
    %v552 = vunpack.c.l.b16 %v513
    %v553 = vunpack.c.l.b16 %v514
    %v554 = vunpack.c.l.b16 %v515
    %v555 = vunpack.c.l.b16 %v516
    %v556 = vunpack.c.l.b16 %v517
    %v557 = vunpack.c.l.b16 %v518
    %v558 = vunpack.c.l.b16 %v519
    %v559 = vpack.c.b16 %v544, %v543
    %v560 = vpack.c.b16 %v546, %v545
    %v561 = vpack.c.b16 %v548, %v547
    %v562 = vpack.c.b16 %v550, %v549
    %v563 = vpack.c.b16 %v552, %v551
    %v564 = vpack.c.b16 %v554, %v553
    %v565 = vpack.c.b16 %v556, %v555
    %v566 = vpack.c.b16 %v558, %v557
    %575 = vmatprep.subr.bf16.mxu0 0
    %576 = vmatpush1.bf16.msra.mxu0 %v559
    %577 = vmatprep.subr.bf16.mxu0 0
    %578 = vmatpush1.bf16.msra.mxu0 %v560
    %579 = vmatprep.subr.bf16.mxu0 0
    %580 = vmatpush1.bf16.msra.mxu0 %v561
    %581 = vmatprep.subr.bf16.mxu0 0
    %582 = vmatpush1.bf16.msra.mxu0 %v562
    %583 = vmatprep.subr.bf16.mxu0 0
    %584 = vmatpush1.bf16.msra.mxu0 %v563
    %585 = vmatprep.subr.bf16.mxu0 0
    %586 = vmatpush1.bf16.msra.mxu0 %v564
    %587 = vmatprep.subr.bf16.mxu0 0
    %588 = vmatpush1.bf16.msra.mxu0 %v565
    %589 = vmatprep.subr.bf16.mxu0 0
    %590 = vmatpush1.bf16.msra.mxu0 %v566
    %591 = vmatprep.subr.bf16.mxu0 0
    %592 = vmatpush1.bf16.msra.mxu0 0
    %593 = vmatprep.subr.bf16.mxu0 0
    %594 = vmatpush1.bf16.msra.mxu0 0
    %595 = vmatprep.subr.bf16.mxu0 0
    %596 = vmatpush1.bf16.msra.mxu0 0
    %597 = vmatprep.subr.bf16.mxu0 0
    %598 = vmatpush1.bf16.msra.mxu0 0
    %599 = vmatprep.subr.bf16.mxu0 0
    %600 = vmatpush1.bf16.msra.mxu0 0
    %601 = vmatprep.subr.bf16.mxu0 0
    %602 = vmatpush1.bf16.msra.mxu0 0
    %603 = vmatprep.subr.bf16.mxu0 0
    %604 = vmatpush1.bf16.msra.mxu0 0
    %605 = vmatprep.subr.bf16.mxu0 0
    %606 = vmatpush1.bf16.msra.mxu0 0
    %607 = vmatprep.mubr.bf16.mxu0 0
    %608 = vmatmul.mubr.bf16.gmra.mrb[0].mxu0 %v503
    %v609 = vpop.f32.mrb[0].mxu0
    %v610 = vadd.f32 %v525, %v609
    %v611 = vpop.f32.mrb[0].mxu0
    %v612 = vpop.f32.mrb[0].mxu0
    %v613 = vpop.f32.mrb[0].mxu0
    %614 = vdwg.mxu0
    %v615 = vand.u32 2147483647, %v610
    %v616 = vsub.f32 0.0, %v615
    %v617 = vmul.f32 %v616, 1.442695
    %v618 = vpow.pop %v617
    %vm619 = vcmp.ge.f32.partialorder %v610, 0.0
    %v620 = vsel %vm619, 1.0, %v618
    %v621 = vadd.f32 %v618, 1.0
    %v622 = vrcp.pop %v621
    %v623 = vmul.f32 %v620, %v622
    %v624 = vmax.f32 %v623, 0.0
    %v625 = vmin.f32 %v624, 1.0
    %v626 = vpack.c.bf16 %v625, %v625
    %627 = vst [vmem:[#allocation13] sm:$0xf] %v626
    // Predicated region
    $region66: #{tpu_custom_call.1} parent=1 // pred_check
      _
    $region67: #{tpu_custom_call.1} parent=1 // pred_check_branch
      %629 = sbr.rel (0) target = $region69
    $region68: #{tpu_custom_call.1} parent=1 // pred_region
      %s631 = ssub.s32 64, 64
      %632 = vsyncadd [#allocation4], %s631
      %s634 = sshll.u32 [#allocation13], 4
      %s635 = int_to_ptr.vmem [resolvable:$true] %s634
      %637 = dma.vmem_to_hbm [thread:$0]  %s635, 64, %s10, [#allocation4]
    $region69: #{tpu_custom_call.1} parent=1 // pred_fallthru
      _
    // Predicated region
    $region70: #{tpu_custom_call.1} parent=1 // pred_check
      _
    $region71: #{tpu_custom_call.1} parent=1 // pred_check_branch
      %639 = sbr.rel (0) target = $region73
    $region72: #{tpu_custom_call.1} parent=1 // pred_region
      %s641 = ssub.s32 256, 256
      %642 = vsyncadd [#allocation15], %s641
      %s644 = sshll.u32 [#allocation14], 4
      %s645 = int_to_ptr.vmem [resolvable:$true] %s644
      %647 = dma.vmem_to_hbm [thread:$0]  %s645, 256, %s11, [#allocation15]
    $region73: #{tpu_custom_call.1} parent=1 // pred_fallthru
      _
    // Predicated region
    $region74: #{tpu_custom_call.1} parent=1 // pred_check
      _
    $region75: #{tpu_custom_call.1} parent=1 // pred_check_branch
      %649 = sbr.rel (0) target = $region77
    $region76: #{tpu_custom_call.1} parent=1 // pred_region
      %650 = dma.done [#allocation4], 64
    $region77: #{tpu_custom_call.1} parent=1 // pred_fallthru
      _
    // Predicated region
    $region78: #{tpu_custom_call.1} parent=1 // pred_check
      _
    $region79: #{tpu_custom_call.1} parent=1 // pred_check_branch
      %652 = sbr.rel (0) target = $region81
    $region80: #{tpu_custom_call.1} parent=1 // pred_region
      %653 = dma.done [#allocation15], 256
    $region81: #{tpu_custom_call.1} parent=1 // pred_fallthru
      _
    %654 = vsyncpa [#allocation3], 1
    %655 = vsyncpa [#allocation6], 1
    %656 = vsyncpa [#allocation9], 1
    %657 = vsyncpa [#allocation12], 1
    %658 = vsyncpa [#allocation4], 1
    %659 = vsyncpa [#allocation15], 1

// kernel: tpu_custom_call.1
$region0: #{tpu_custom_call.1}
  #allocation0 [shape = 'u32[]', space=smem, size = 0x4, offset = 0x4, fixed_abs, tag = 'smem constant byte address 0x4 - core index']
  #allocation1 [shape = 'u32[144,128]{1,0:T(1,128)}', space=vmem, size = 0x12000, scoped, tag = 'internal scratch']
  %s0 = inlined_call_operand.hbm [shape: bf16[8,128], index: 0, kind: input, shape index: {}]
  %s1 = inlined_call_operand.hbm [shape: bf16[8,128], index: 1, kind: input, shape index: {}]
  %s2 = inlined_call_operand.hbm [shape: bf16[128,128], index: 2, kind: input, shape index: {}]
  %s3 = inlined_call_operand.vmem [shape: f32[1,128], index: 3, kind: input, shape index: {}]
  %s4 = inlined_call_operand.hbm [shape: bf16[128,256], index: 4, kind: input, shape index: {}]
  %s5 = inlined_call_operand.vmem [shape: f32[1,256], index: 5, kind: input, shape index: {}]
  %s6 = inlined_call_operand.hbm [shape: bf16[128,128], index: 6, kind: input, shape index: {}]
  %s7 = inlined_call_operand.vmem [shape: f32[1,128], index: 7, kind: input, shape index: {}]
  %s8 = inlined_call_operand.hbm [shape: bf16[128,128], index: 8, kind: input, shape index: {}]
  %s9 = inlined_call_operand.vmem [shape: f32[1,128], index: 9, kind: input, shape index: {}]
  %s10 = inlined_call_operand.hbm [shape: bf16[8,128], index: 10, kind: output, shape index: {0}]
  %s11 = inlined_call_operand.hbm [shape: f32[8,256], index: 11, kind: output, shape index: {1}]
  %12 = xla_tuple %s10, %s11
  %s13 = sld [smem:[#allocation0]]
  $region82: #{tpu_custom_call.1} parent=0
    _
  %s15 = ssub.s32 1, %s13
  %s16 = scalar_select 0, %s15, %s13
  $region1: #{tpu_custom_call.1} parent=0
    #allocation2 [shape = 'u8[2048]{0}', space=vmem, size = 0x800, scoped, tag = 'input window, operand 0, single buffered']
    #allocation3 [shape = 's32[1]{0}', space=sflag, size = 0x4, scoped, tag = 'scoped memory for tpu_custom_call.1']
    #allocation4 [shape = 's32[1]{0}', space=sflag, size = 0x4, scoped, tag = 'scoped memory for tpu_custom_call.1']
    #allocation5 [shape = 'u8[2048]{0}', space=vmem, size = 0x800, scoped, tag = 'input window, operand 1, single buffered']
    #allocation6 [shape = 's32[1]{0}', space=sflag, size = 0x4, scoped, tag = 'scoped memory for tpu_custom_call.1']
    #allocation7 [shape = 'u8[32768]{0}', space=vmem, size = 0x8000, scoped, tag = 'input window, operand 2, single buffered']
    #allocation8 [shape = 'u8[65536]{0}', space=vmem, size = 0x10000, scoped, tag = 'input window, operand 4, single buffered']
    #allocation9 [shape = 's32[1]{0}', space=sflag, size = 0x4, scoped, tag = 'scoped memory for tpu_custom_call.1']
    #allocation10 [shape = 'u8[32768]{0}', space=vmem, size = 0x8000, scoped, tag = 'input window, operand 6, single buffered']
    #allocation11 [shape = 'u8[32768]{0}', space=vmem, size = 0x8000, scoped, tag = 'input window, operand 8, single buffered']
    #allocation12 [shape = 's32[1]{0}', space=sflag, size = 0x4, scoped, tag = 'scoped memory for tpu_custom_call.1']
    #allocation13 [shape = 'u8[2048]{0}', space=vmem, size = 0x800, scoped, tag = 'output window, operand 0, single buffered']
    #allocation14 [shape = 'u8[8192]{0}', space=vmem, size = 0x2000, scoped, tag = 'output window, operand 1, single buffered']
    #allocation15 [shape = 's32[1]{0}', space=sflag, size = 0x4, scoped, tag = 'scoped memory for tpu_custom_call.1']
    %17 = vsyncpa [#allocation3], 0
    %18 = vsyncpa [#allocation6], 0
    %19 = vsyncpa [#allocation9], 0
    %20 = vsyncpa [#allocation12], 0
    %21 = vsyncpa [#allocation4], 0
    %22 = vsyncpa [#allocation15], 0
    // Predicated region
    $region2: #{tpu_custom_call.1} parent=1 // pred_check
      _
    $region3: #{tpu_custom_call.1} parent=1 // pred_check_branch
      %24 = sbr.rel (0) target = $region5
    $region4: #{tpu_custom_call.1} parent=1 // pred_region
      %s26 = ssub.s32 64, 64
      %27 = vsyncadd [#allocation3], %s26
      %s29 = sshll.u32 [#allocation2], 4
      %s30 = int_to_ptr.vmem [resolvable:$true] %s29
      %32 = dma.hbm_to_vmem [thread:$0]  %s0, 64, %s30, [#allocation3]
    $region5: #{tpu_custom_call.1} parent=1 // pred_fallthru
      _
    // Predicated region
    $region6: #{tpu_custom_call.1} parent=1 // pred_check
      _
    $region7: #{tpu_custom_call.1} parent=1 // pred_check_branch
      %34 = sbr.rel (0) target = $region9
    $region8: #{tpu_custom_call.1} parent=1 // pred_region
      %s36 = ssub.s32 64, 64
      %37 = vsyncadd [#allocation6], %s36
      %s39 = sshll.u32 [#allocation5], 4
      %s40 = int_to_ptr.vmem [resolvable:$true] %s39
      %42 = dma.hbm_to_vmem [thread:$0]  %s1, 64, %s40, [#allocation6]
    $region9: #{tpu_custom_call.1} parent=1 // pred_fallthru
      _
    // Predicated region
    $region10: #{tpu_custom_call.1} parent=1 // pred_check
      _
    $region11: #{tpu_custom_call.1} parent=1 // pred_check_branch
      %44 = sbr.rel (0) target = $region13
    $region12: #{tpu_custom_call.1} parent=1 // pred_region
      %s46 = ssub.s32 1024, 1024
      %47 = vsyncadd [#allocation6], %s46
      %s48 = sshll.u32 [#allocation7], 4
      %s49 = int_to_ptr.vmem [resolvable:$true] %s48
      %54 = dma.hbm_to_vmem [thread:$0]  %s2, 1024, %s49, [#allocation6], 64, 64, 4
    $region13: #{tpu_custom_call.1} parent=1 // pred_fallthru
      _
    // Predicated region
    $region14: #{tpu_custom_call.1} parent=1 // pred_check
      _
    $region15: #{tpu_custom_call.1} parent=1 // pred_check_branch
      %56 = sbr.rel (0) target = $region17
    $region16: #{tpu_custom_call.1} parent=1 // pred_region
      _
    $region17: #{tpu_custom_call.1} parent=1 // pred_fallthru
      _
    // Predicated region
    $region18: #{tpu_custom_call.1} parent=1 // pred_check
      _
    $region19: #{tpu_custom_call.1} parent=1 // pred_check_branch
      %58 = sbr.rel (0) target = $region21
    $region20: #{tpu_custom_call.1} parent=1 // pred_region
      %s60 = ssub.s32 2048, 2048
      %61 = vsyncadd [#allocation9], %s60
      %s62 = sshll.u32 [#allocation8], 4
      %s63 = int_to_ptr.vmem [resolvable:$true] %s62
      %68 = dma.hbm_to_vmem [thread:$0]  %s4, 2048, %s63, [#allocation9], 128, 128, 8
    $region21: #{tpu_custom_call.1} parent=1 // pred_fallthru
      _
    // Predicated region
    $region22: #{tpu_custom_call.1} parent=1 // pred_check
      _
    $region23: #{tpu_custom_call.1} parent=1 // pred_check_branch
      %70 = sbr.rel (0) target = $region25
    $region24: #{tpu_custom_call.1} parent=1 // pred_region
      _
    $region25: #{tpu_custom_call.1} parent=1 // pred_fallthru
      _
    // Predicated region
    $region26: #{tpu_custom_call.1} parent=1 // pred_check
      _
    $region27: #{tpu_custom_call.1} parent=1 // pred_check_branch
      %72 = sbr.rel (0) target = $region29
    $region28: #{tpu_custom_call.1} parent=1 // pred_region
      %s74 = ssub.s32 1024, 1024
      %75 = vsyncadd [#allocation9], %s74
      %s76 = sshll.u32 [#allocation10], 4
      %s77 = int_to_ptr.vmem [resolvable:$true] %s76
      %82 = dma.hbm_to_vmem [thread:$0]  %s6, 1024, %s77, [#allocation9], 64, 64, 4
    $region29: #{tpu_custom_call.1} parent=1 // pred_fallthru
      _
    // Predicated region
    $region30: #{tpu_custom_call.1} parent=1 // pred_check
      _
    $region31: #{tpu_custom_call.1} parent=1 // pred_check_branch
      %84 = sbr.rel (0) target = $region33
    $region32: #{tpu_custom_call.1} parent=1 // pred_region
      _
    $region33: #{tpu_custom_call.1} parent=1 // pred_fallthru
      _
    // Predicated region
    $region34: #{tpu_custom_call.1} parent=1 // pred_check
      _
    $region35: #{tpu_custom_call.1} parent=1 // pred_check_branch
      %86 = sbr.rel (0) target = $region37
    $region36: #{tpu_custom_call.1} parent=1 // pred_region
      %s88 = ssub.s32 1024, 1024
      %89 = vsyncadd [#allocation12], %s88
      %s90 = sshll.u32 [#allocation11], 4
      %s91 = int_to_ptr.vmem [resolvable:$true] %s90
      %96 = dma.hbm_to_vmem [thread:$0]  %s8, 1024, %s91, [#allocation12], 64, 64, 4
    $region37: #{tpu_custom_call.1} parent=1 // pred_fallthru
      _
    // Predicated region
    $region38: #{tpu_custom_call.1} parent=1 // pred_check
      _
    $region39: #{tpu_custom_call.1} parent=1 // pred_check_branch
      %98 = sbr.rel (0) target = $region41
    $region40: #{tpu_custom_call.1} parent=1 // pred_region
      _
    $region41: #{tpu_custom_call.1} parent=1 // pred_fallthru
      _
    // Predicated region
    $region42: #{tpu_custom_call.1} parent=1 // pred_check
      _
    $region43: #{tpu_custom_call.1} parent=1 // pred_check_branch
      %100 = sbr.rel (0) target = $region45
    $region44: #{tpu_custom_call.1} parent=1 // pred_region
      %101 = dma.done [#allocation3], 64
    $region45: #{tpu_custom_call.1} parent=1 // pred_fallthru
      _
    // Predicated region
    $region46: #{tpu_custom_call.1} parent=1 // pred_check
      _
    $region47: #{tpu_custom_call.1} parent=1 // pred_check_branch
      %103 = sbr.rel (0) target = $region49
    $region48: #{tpu_custom_call.1} parent=1 // pred_region
      %104 = dma.done [#allocation6], 64
    $region49: #{tpu_custom_call.1} parent=1 // pred_fallthru
      _
    // Predicated region
    $region50: #{tpu_custom_call.1} parent=1 // pred_check
      _
    $region51: #{tpu_custom_call.1} parent=1 // pred_check_branch
      %106 = sbr.rel (0) target = $region53
    $region52: #{tpu_custom_call.1} parent=1 // pred_region
      %107 = dma.done [#allocation6], 1024
    $region53: #{tpu_custom_call.1} parent=1 // pred_fallthru
      _
    // Predicated region
    $region54: #{tpu_custom_call.1} parent=1 // pred_check
      _
    $region55: #{tpu_custom_call.1} parent=1 // pred_check_branch
      %109 = sbr.rel (0) target = $region57
    $region56: #{tpu_custom_call.1} parent=1 // pred_region
      %110 = dma.done [#allocation9], 2048
    $region57: #{tpu_custom_call.1} parent=1 // pred_fallthru
      _
    // Predicated region
    $region58: #{tpu_custom_call.1} parent=1 // pred_check
      _
    $region59: #{tpu_custom_call.1} parent=1 // pred_check_branch
      %112 = sbr.rel (0) target = $region61
    $region60: #{tpu_custom_call.1} parent=1 // pred_region
      %113 = dma.done [#allocation9], 1024
    $region61: #{tpu_custom_call.1} parent=1 // pred_fallthru
      _
    // Predicated region
    $region62: #{tpu_custom_call.1} parent=1 // pred_check
      _
    $region63: #{tpu_custom_call.1} parent=1 // pred_check_branch
      %115 = sbr.rel (0) target = $region65
    $region64: #{tpu_custom_call.1} parent=1 // pred_region
      %116 = dma.done [#allocation12], 1024
    $region65: #{tpu_custom_call.1} parent=1 // pred_fallthru
      _
    %v118 = vld [vmem:[#allocation2] sm:$0xf]
    %v119 = vld [vmem:[#allocation7] sm:$0xf]
    %v120 = vld [vmem:[#allocation7 + $0x4] sm:$0xf]
    %v121 = vld [vmem:[#allocation7 + $0x8] sm:$0xf]
    %v122 = vld [vmem:[#allocation7 + $0xc] sm:$0xf]
    %v123 = vld [vmem:[#allocation7 + $0x10] sm:$0xf]
    %v124 = vld [vmem:[#allocation7 + $0x14] sm:$0xf]
    %v125 = vld [vmem:[#allocation7 + $0x18] sm:$0xf]
    %v126 = vld [vmem:[#allocation7 + $0x1c] sm:$0xf]
    %v127 = vld [vmem:[#allocation7 + $0x20] sm:$0xf]
    %v128 = vld [vmem:[#allocation7 + $0x24] sm:$0xf]
    %v129 = vld [vmem:[#allocation7 + $0x28] sm:$0xf]
    %v130 = vld [vmem:[#allocation7 + $0x2c] sm:$0xf]
    %v131 = vld [vmem:[#allocation7 + $0x30] sm:$0xf]
    %v132 = vld [vmem:[#allocation7 + $0x34] sm:$0xf]
    %v133 = vld [vmem:[#allocation7 + $0x38] sm:$0xf]
    %v134 = vld [vmem:[#allocation7 + $0x3c] sm:$0xf]
    %v135 = vld [vmem:[%s3] sm:$0x1]
    %v137 = vlaneseq
    %v138 = vshrl.u32 %v137, 7
    %v139 = vsub.s32 0, %v138
    %v140 = vrot.slane %v135, %v139
    %v158 = vunpack.c.l.b16 %v119
    %v159 = vunpack.c.l.b16 %v120
    %v160 = vunpack.c.l.b16 %v121
    %v161 = vunpack.c.l.b16 %v122
    %v162 = vunpack.c.l.b16 %v123
    %v163 = vunpack.c.l.b16 %v124
    %v164 = vunpack.c.l.b16 %v125
    %v165 = vunpack.c.l.b16 %v126
    %v166 = vunpack.c.l.b16 %v127
    %v167 = vunpack.c.l.b16 %v128
    %v168 = vunpack.c.l.b16 %v129
    %v169 = vunpack.c.l.b16 %v130
    %v170 = vunpack.c.l.b16 %v131
    %v171 = vunpack.c.l.b16 %v132
    %v172 = vunpack.c.l.b16 %v133
    %v173 = vunpack.c.l.b16 %v134
    %v174 = vpack.c.b16 %v159, %v158
    %v175 = vpack.c.b16 %v161, %v160
    %v176 = vpack.c.b16 %v163, %v162
    %v177 = vpack.c.b16 %v165, %v164
    %v178 = vpack.c.b16 %v167, %v166
    %v179 = vpack.c.b16 %v169, %v168
    %v180 = vpack.c.b16 %v171, %v170
    %v181 = vpack.c.b16 %v173, %v172
    %190 = vmatprep.subr.bf16.mxu0 0
    %191 = vmatpush1.bf16.msra.mxu0 %v174
    %192 = vmatprep.subr.bf16.mxu0 0
    %193 = vmatpush1.bf16.msra.mxu0 %v175
    %194 = vmatprep.subr.bf16.mxu0 0
    %195 = vmatpush1.bf16.msra.mxu0 %v176
    %196 = vmatprep.subr.bf16.mxu0 0
    %197 = vmatpush1.bf16.msra.mxu0 %v177
    %198 = vmatprep.subr.bf16.mxu0 0
    %199 = vmatpush1.bf16.msra.mxu0 %v178
    %200 = vmatprep.subr.bf16.mxu0 0
    %201 = vmatpush1.bf16.msra.mxu0 %v179
    %202 = vmatprep.subr.bf16.mxu0 0
    %203 = vmatpush1.bf16.msra.mxu0 %v180
    %204 = vmatprep.subr.bf16.mxu0 0
    %205 = vmatpush1.bf16.msra.mxu0 %v181
    %206 = vmatprep.subr.bf16.mxu0 0
    %207 = vmatpush1.bf16.msra.mxu0 0
    %208 = vmatprep.subr.bf16.mxu0 0
    %209 = vmatpush1.bf16.msra.mxu0 0
    %210 = vmatprep.subr.bf16.mxu0 0
    %211 = vmatpush1.bf16.msra.mxu0 0
    %212 = vmatprep.subr.bf16.mxu0 0
    %213 = vmatpush1.bf16.msra.mxu0 0
    %214 = vmatprep.subr.bf16.mxu0 0
    %215 = vmatpush1.bf16.msra.mxu0 0
    %216 = vmatprep.subr.bf16.mxu0 0
    %217 = vmatpush1.bf16.msra.mxu0 0
    %218 = vmatprep.subr.bf16.mxu0 0
    %219 = vmatpush1.bf16.msra.mxu0 0
    %220 = vmatprep.subr.bf16.mxu0 0
    %221 = vmatpush1.bf16.msra.mxu0 0
    %222 = vmatprep.mubr.bf16.mxu0 0
    %223 = vmatmul.mubr.bf16.gmra.mrb[0].mxu0 %v118
    %v224 = vpop.f32.mrb[0].mxu0
    %v225 = vadd.f32 %v140, %v224
    %v226 = vpop.f32.mrb[0].mxu0
    %v227 = vpop.f32.mrb[0].mxu0
    %v228 = vpop.f32.mrb[0].mxu0
    %229 = vdwg.mxu0
    %v230 = vmax.f32 %v225, 0.0
    %v231 = vpack.c.bf16 %v230, %v230
    %v232 = vld [vmem:[#allocation8] sm:$0xff]
    %v233 = vld [vmem:[#allocation8 + $0x8] sm:$0xff]
    %v234 = vld [vmem:[#allocation8 + $0x10] sm:$0xff]
    %v235 = vld [vmem:[#allocation8 + $0x18] sm:$0xff]
    %v236 = vld [vmem:[#allocation8 + $0x20] sm:$0xff]
    %v237 = vld [vmem:[#allocation8 + $0x28] sm:$0xff]
    %v238 = vld [vmem:[#allocation8 + $0x30] sm:$0xff]
    %v239 = vld [vmem:[#allocation8 + $0x38] sm:$0xff]
    %v240 = vld [vmem:[#allocation8 + $0x40] sm:$0xff]
    %v241 = vld [vmem:[#allocation8 + $0x48] sm:$0xff]
    %v242 = vld [vmem:[#allocation8 + $0x50] sm:$0xff]
    %v243 = vld [vmem:[#allocation8 + $0x58] sm:$0xff]
    %v244 = vld [vmem:[#allocation8 + $0x60] sm:$0xff]
    %v245 = vld [vmem:[#allocation8 + $0x68] sm:$0xff]
    %v246 = vld [vmem:[#allocation8 + $0x70] sm:$0xff]
    %v247 = vld [vmem:[#allocation8 + $0x78] sm:$0xff]
    %v248 = vld [vmem:[%s5] sm:$0x3]
    %v250 = vlaneseq
    %v251 = vshrl.u32 %v250, 7
    %v252 = vsub.s32 0, %v251
    %v253 = vrot.slane %v248, %v252
    %v254 = vlaneseq
    %v255 = vshrl.u32 %v254, 7
    %v256 = vsub.s32 1, %v255
    %v257 = vrot.slane %v248, %v256
    %v276 = vunpack.c.l.b16 %v232
    %v277 = vunpack.c.h.b16 %v232
    %v278 = vunpack.c.l.b16 %v233
    %v279 = vunpack.c.h.b16 %v233
    %v280 = vunpack.c.l.b16 %v234
    %v281 = vunpack.c.h.b16 %v234
    %v282 = vunpack.c.l.b16 %v235
    %v283 = vunpack.c.h.b16 %v235
    %v284 = vunpack.c.l.b16 %v236
    %v285 = vunpack.c.h.b16 %v236
    %v286 = vunpack.c.l.b16 %v237
    %v287 = vunpack.c.h.b16 %v237
    %v288 = vunpack.c.l.b16 %v238
    %v289 = vunpack.c.h.b16 %v238
    %v290 = vunpack.c.l.b16 %v239
    %v291 = vunpack.c.h.b16 %v239
    %v292 = vunpack.c.l.b16 %v240
    %v293 = vunpack.c.h.b16 %v240
    %v294 = vunpack.c.l.b16 %v241
    %v295 = vunpack.c.h.b16 %v241
    %v296 = vunpack.c.l.b16 %v242
    %v297 = vunpack.c.h.b16 %v242
    %v298 = vunpack.c.l.b16 %v243
    %v299 = vunpack.c.h.b16 %v243
    %v300 = vunpack.c.l.b16 %v244
    %v301 = vunpack.c.h.b16 %v244
    %v302 = vunpack.c.l.b16 %v245
    %v303 = vunpack.c.h.b16 %v245
    %v304 = vunpack.c.l.b16 %v246
    %v305 = vunpack.c.h.b16 %v246
    %v306 = vunpack.c.l.b16 %v247
    %v307 = vunpack.c.h.b16 %v247
    %v308 = vpack.c.b16 %v278, %v276
    %v309 = vpack.c.b16 %v279, %v277
    %v310 = vpack.c.b16 %v282, %v280
    %v311 = vpack.c.b16 %v283, %v281
    %v312 = vpack.c.b16 %v286, %v284
    %v313 = vpack.c.b16 %v287, %v285
    %v314 = vpack.c.b16 %v290, %v288
    %v315 = vpack.c.b16 %v291, %v289
    %v316 = vpack.c.b16 %v294, %v292
    %v317 = vpack.c.b16 %v295, %v293
    %v318 = vpack.c.b16 %v298, %v296
    %v319 = vpack.c.b16 %v299, %v297
    %v320 = vpack.c.b16 %v302, %v300
    %v321 = vpack.c.b16 %v303, %v301
    %v322 = vpack.c.b16 %v306, %v304
    %v323 = vpack.c.b16 %v307, %v305
    %340 = vmatprep.subr.bf16.mxu0 %v309
    %341 = vmatpush1.bf16.msra.mxu0 %v308
    %342 = vmatprep.subr.bf16.mxu0 %v311
    %343 = vmatpush1.bf16.msra.mxu0 %v310
    %344 = vmatprep.subr.bf16.mxu0 %v313
    %345 = vmatpush1.bf16.msra.mxu0 %v312
    %346 = vmatprep.subr.bf16.mxu0 %v315
    %347 = vmatpush1.bf16.msra.mxu0 %v314
    %348 = vmatprep.subr.bf16.mxu0 %v317
    %349 = vmatpush1.bf16.msra.mxu0 %v316
    %350 = vmatprep.subr.bf16.mxu0 %v319
    %351 = vmatpush1.bf16.msra.mxu0 %v318
    %352 = vmatprep.subr.bf16.mxu0 %v321
    %353 = vmatpush1.bf16.msra.mxu0 %v320
    %354 = vmatprep.subr.bf16.mxu0 %v323
    %355 = vmatpush1.bf16.msra.mxu0 %v322
    %356 = vmatprep.subr.bf16.mxu0 0
    %357 = vmatpush1.bf16.msra.mxu0 0
    %358 = vmatprep.subr.bf16.mxu0 0
    %359 = vmatpush1.bf16.msra.mxu0 0
    %360 = vmatprep.subr.bf16.mxu0 0
    %361 = vmatpush1.bf16.msra.mxu0 0
    %362 = vmatprep.subr.bf16.mxu0 0
    %363 = vmatpush1.bf16.msra.mxu0 0
    %364 = vmatprep.subr.bf16.mxu0 0
    %365 = vmatpush1.bf16.msra.mxu0 0
    %366 = vmatprep.subr.bf16.mxu0 0
    %367 = vmatpush1.bf16.msra.mxu0 0
    %368 = vmatprep.subr.bf16.mxu0 0
    %369 = vmatpush1.bf16.msra.mxu0 0
    %370 = vmatprep.subr.bf16.mxu0 0
    %371 = vmatpush1.bf16.msra.mxu0 0
    %372 = vmatprep.mubr.bf16.mxu0 0
    %373 = vmatmul.mubr.bf16.gmra.mrb[0].mxu0 %v231
    %v374 = vpop.f32.mrb[0].mxu0
    %v375 = vadd.f32 %v253, %v374
    %v376 = vpop.f32.mrb[0].mxu0
    %v377 = vadd.f32 %v257, %v376
    %v378 = vpop.f32.mrb[0].mxu0
    %v379 = vpop.f32.mrb[0].mxu0
    %380 = vdwg.mxu0
    %381 = vst [vmem:[#allocation14] sm:$0xff] %v375
    %382 = vst [vmem:[#allocation14 + $0x8] sm:$0xff] %v377
    %v383 = vmul.f32 %v377, 0.5
    %v384 = vmul.f32 %v383, 1.442695
    %v385 = vpow.pop %v384
    %v386 = vld [vmem:[#allocation5] sm:$0xf]
    %v387 = vunpack.c.l.bf16 %v386
    %v388 = vmul.f32 %v387, %v385
    %v389 = vadd.f32 %v388, %v375
    %v390 = vpack.c.bf16 %v389, %v389
    %v391 = vld [vmem:[#allocation10] sm:$0xf]
    %v392 = vld [vmem:[#allocation10 + $0x4] sm:$0xf]
    %v393 = vld [vmem:[#allocation10 + $0x8] sm:$0xf]
    %v394 = vld [vmem:[#allocation10 + $0xc] sm:$0xf]
    %v395 = vld [vmem:[#allocation10 + $0x10] sm:$0xf]
    %v396 = vld [vmem:[#allocation10 + $0x14] sm:$0xf]
    %v397 = vld [vmem:[#allocation10 + $0x18] sm:$0xf]
    %v398 = vld [vmem:[#allocation10 + $0x1c] sm:$0xf]
    %v399 = vld [vmem:[#allocation10 + $0x20] sm:$0xf]
    %v400 = vld [vmem:[#allocation10 + $0x24] sm:$0xf]
    %v401 = vld [vmem:[#allocation10 + $0x28] sm:$0xf]
    %v402 = vld [vmem:[#allocation10 + $0x2c] sm:$0xf]
    %v403 = vld [vmem:[#allocation10 + $0x30] sm:$0xf]
    %v404 = vld [vmem:[#allocation10 + $0x34] sm:$0xf]
    %v405 = vld [vmem:[#allocation10 + $0x38] sm:$0xf]
    %v406 = vld [vmem:[#allocation10 + $0x3c] sm:$0xf]
    %v407 = vld [vmem:[%s7] sm:$0x1]
    %v409 = vlaneseq
    %v410 = vshrl.u32 %v409, 7
    %v411 = vsub.s32 0, %v410
    %v412 = vrot.slane %v407, %v411
    %v430 = vunpack.c.l.b16 %v391
    %v431 = vunpack.c.l.b16 %v392
    %v432 = vunpack.c.l.b16 %v393
    %v433 = vunpack.c.l.b16 %v394
    %v434 = vunpack.c.l.b16 %v395
    %v435 = vunpack.c.l.b16 %v396
    %v436 = vunpack.c.l.b16 %v397
    %v437 = vunpack.c.l.b16 %v398
    %v438 = vunpack.c.l.b16 %v399
    %v439 = vunpack.c.l.b16 %v400
    %v440 = vunpack.c.l.b16 %v401
    %v441 = vunpack.c.l.b16 %v402
    %v442 = vunpack.c.l.b16 %v403
    %v443 = vunpack.c.l.b16 %v404
    %v444 = vunpack.c.l.b16 %v405
    %v445 = vunpack.c.l.b16 %v406
    %v446 = vpack.c.b16 %v431, %v430
    %v447 = vpack.c.b16 %v433, %v432
    %v448 = vpack.c.b16 %v435, %v434
    %v449 = vpack.c.b16 %v437, %v436
    %v450 = vpack.c.b16 %v439, %v438
    %v451 = vpack.c.b16 %v441, %v440
    %v452 = vpack.c.b16 %v443, %v442
    %v453 = vpack.c.b16 %v445, %v444
    %462 = vmatprep.subr.bf16.mxu0 0
    %463 = vmatpush1.bf16.msra.mxu0 %v446
    %464 = vmatprep.subr.bf16.mxu0 0
    %465 = vmatpush1.bf16.msra.mxu0 %v447
    %466 = vmatprep.subr.bf16.mxu0 0
    %467 = vmatpush1.bf16.msra.mxu0 %v448
    %468 = vmatprep.subr.bf16.mxu0 0
    %469 = vmatpush1.bf16.msra.mxu0 %v449
    %470 = vmatprep.subr.bf16.mxu0 0
    %471 = vmatpush1.bf16.msra.mxu0 %v450
    %472 = vmatprep.subr.bf16.mxu0 0
    %473 = vmatpush1.bf16.msra.mxu0 %v451
    %474 = vmatprep.subr.bf16.mxu0 0
    %475 = vmatpush1.bf16.msra.mxu0 %v452
    %476 = vmatprep.subr.bf16.mxu0 0
    %477 = vmatpush1.bf16.msra.mxu0 %v453
    %478 = vmatprep.subr.bf16.mxu0 0
    %479 = vmatpush1.bf16.msra.mxu0 0
    %480 = vmatprep.subr.bf16.mxu0 0
    %481 = vmatpush1.bf16.msra.mxu0 0
    %482 = vmatprep.subr.bf16.mxu0 0
    %483 = vmatpush1.bf16.msra.mxu0 0
    %484 = vmatprep.subr.bf16.mxu0 0
    %485 = vmatpush1.bf16.msra.mxu0 0
    %486 = vmatprep.subr.bf16.mxu0 0
    %487 = vmatpush1.bf16.msra.mxu0 0
    %488 = vmatprep.subr.bf16.mxu0 0
    %489 = vmatpush1.bf16.msra.mxu0 0
    %490 = vmatprep.subr.bf16.mxu0 0
    %491 = vmatpush1.bf16.msra.mxu0 0
    %492 = vmatprep.subr.bf16.mxu0 0
    %493 = vmatpush1.bf16.msra.mxu0 0
    %494 = vmatprep.mubr.bf16.mxu0 0
    %495 = vmatmul.mubr.bf16.gmra.mrb[0].mxu0 %v390
    %v496 = vpop.f32.mrb[0].mxu0
    %v497 = vadd.f32 %v412, %v496
    %v498 = vpop.f32.mrb[0].mxu0
    %v499 = vpop.f32.mrb[0].mxu0
    %v500 = vpop.f32.mrb[0].mxu0
    %501 = vdwg.mxu0
    %v502 = vmax.f32 %v497, 0.0
    %v503 = vpack.c.bf16 %v502, %v502
    %v504 = vld [vmem:[#allocation11] sm:$0xf]
    %v505 = vld [vmem:[#allocation11 + $0x4] sm:$0xf]
    %v506 = vld [vmem:[#allocation11 + $0x8] sm:$0xf]
    %v507 = vld [vmem:[#allocation11 + $0xc] sm:$0xf]
    %v508 = vld [vmem:[#allocation11 + $0x10] sm:$0xf]
    %v509 = vld [vmem:[#allocation11 + $0x14] sm:$0xf]
    %v510 = vld [vmem:[#allocation11 + $0x18] sm:$0xf]
    %v511 = vld [vmem:[#allocation11 + $0x1c] sm:$0xf]
    %v512 = vld [vmem:[#allocation11 + $0x20] sm:$0xf]
    %v513 = vld [vmem:[#allocation11 + $0x24] sm:$0xf]
    %v514 = vld [vmem:[#allocation11 + $0x28] sm:$0xf]
    %v515 = vld [vmem:[#allocation11 + $0x2c] sm:$0xf]
    %v516 = vld [vmem:[#allocation11 + $0x30] sm:$0xf]
    %v517 = vld [vmem:[#allocation11 + $0x34] sm:$0xf]
    %v518 = vld [vmem:[#allocation11 + $0x38] sm:$0xf]
    %v519 = vld [vmem:[#allocation11 + $0x3c] sm:$0xf]
    %v520 = vld [vmem:[%s9] sm:$0x1]
    %v522 = vlaneseq
    %v523 = vshrl.u32 %v522, 7
    %v524 = vsub.s32 0, %v523
    %v525 = vrot.slane %v520, %v524
    %v543 = vunpack.c.l.b16 %v504
    %v544 = vunpack.c.l.b16 %v505
    %v545 = vunpack.c.l.b16 %v506
    %v546 = vunpack.c.l.b16 %v507
    %v547 = vunpack.c.l.b16 %v508
    %v548 = vunpack.c.l.b16 %v509
    %v549 = vunpack.c.l.b16 %v510
    %v550 = vunpack.c.l.b16 %v511
    %v551 = vunpack.c.l.b16 %v512
    %v552 = vunpack.c.l.b16 %v513
    %v553 = vunpack.c.l.b16 %v514
    %v554 = vunpack.c.l.b16 %v515
    %v555 = vunpack.c.l.b16 %v516
    %v556 = vunpack.c.l.b16 %v517
    %v557 = vunpack.c.l.b16 %v518
    %v558 = vunpack.c.l.b16 %v519
    %v559 = vpack.c.b16 %v544, %v543
    %v560 = vpack.c.b16 %v546, %v545
    %v561 = vpack.c.b16 %v548, %v547
    %v562 = vpack.c.b16 %v550, %v549
    %v563 = vpack.c.b16 %v552, %v551
    %v564 = vpack.c.b16 %v554, %v553
    %v565 = vpack.c.b16 %v556, %v555
    %v566 = vpack.c.b16 %v558, %v557
    %575 = vmatprep.subr.bf16.mxu0 0
    %576 = vmatpush1.bf16.msra.mxu0 %v559
    %577 = vmatprep.subr.bf16.mxu0 0
    %578 = vmatpush1.bf16.msra.mxu0 %v560
    %579 = vmatprep.subr.bf16.mxu0 0
    %580 = vmatpush1.bf16.msra.mxu0 %v561
    %581 = vmatprep.subr.bf16.mxu0 0
    %582 = vmatpush1.bf16.msra.mxu0 %v562
    %583 = vmatprep.subr.bf16.mxu0 0
    %584 = vmatpush1.bf16.msra.mxu0 %v563
    %585 = vmatprep.subr.bf16.mxu0 0
    %586 = vmatpush1.bf16.msra.mxu0 %v564
    %587 = vmatprep.subr.bf16.mxu0 0
    %588 = vmatpush1.bf16.msra.mxu0 %v565
    %589 = vmatprep.subr.bf16.mxu0 0
    %590 = vmatpush1.bf16.msra.mxu0 %v566
    %591 = vmatprep.subr.bf16.mxu0 0
    %592 = vmatpush1.bf16.msra.mxu0 0
    %593 = vmatprep.subr.bf16.mxu0 0
    %594 = vmatpush1.bf16.msra.mxu0 0
    %595 = vmatprep.subr.bf16.mxu0 0
    %596 = vmatpush1.bf16.msra.mxu0 0
    %597 = vmatprep.subr.bf16.mxu0 0
    %598 = vmatpush1.bf16.msra.mxu0 0
    %599 = vmatprep.subr.bf16.mxu0 0
    %600 = vmatpush1.bf16.msra.mxu0 0
    %601 = vmatprep.subr.bf16.mxu0 0
    %602 = vmatpush1.bf16.msra.mxu0 0
    %603 = vmatprep.subr.bf16.mxu0 0
    %604 = vmatpush1.bf16.msra.mxu0 0
    %605 = vmatprep.subr.bf16.mxu0 0
    %606 = vmatpush1.bf16.msra.mxu0 0
    %607 = vmatprep.mubr.bf16.mxu0 0
    %608 = vmatmul.mubr.bf16.gmra.mrb[0].mxu0 %v503
    %v609 = vpop.f32.mrb[0].mxu0
    %v610 = vadd.f32 %v525, %v609
    %v611 = vpop.f32.mrb[0].mxu0
    %v612 = vpop.f32.mrb[0].mxu0
    %v613 = vpop.f32.mrb[0].mxu0
    %614 = vdwg.mxu0
    %v615 = vand.u32 2147483647, %v610
    %v616 = vsub.f32 0.0, %v615
    %v617 = vmul.f32 %v616, 1.442695
    %v618 = vpow.pop %v617
    %vm619 = vcmp.ge.f32.partialorder %v610, 0.0
    %v620 = vsel %vm619, 1.0, %v618
    %v621 = vadd.f32 %v618, 1.0
    %v622 = vrcp.pop %v621
    %v623 = vmul.f32 %v620, %v622
    %v624 = vmax.f32 %v623, 0.0
    %v625 = vmin.f32 %v624, 1.0
    %v626 = vpack.c.bf16 %v625, %v625
    %627 = vst [vmem:[#allocation13] sm:$0xf] %v626
    // Predicated region
    $region66: #{tpu_custom_call.1} parent=1 // pred_check
      _
    $region67: #{tpu_custom_call.1} parent=1 // pred_check_branch
      %629 = sbr.rel (0) target = $region69
    $region68: #{tpu_custom_call.1} parent=1 // pred_region
      %s631 = ssub.s32 64, 64
      %632 = vsyncadd [#allocation4], %s631
      %s634 = sshll.u32 [#allocation13], 4
      %s635 = int_to_ptr.vmem [resolvable:$true] %s634
      %637 = dma.vmem_to_hbm [thread:$0]  %s635, 64, %s10, [#allocation4]
    $region69: #{tpu_custom_call.1} parent=1 // pred_fallthru
      _
    // Predicated region
    $region70: #{tpu_custom_call.1} parent=1 // pred_check
      _
    $region71: #{tpu_custom_call.1} parent=1 // pred_check_branch
      %639 = sbr.rel (0) target = $region73
    $region72: #{tpu_custom_call.1} parent=1 // pred_region
      %s641 = ssub.s32 256, 256
      %642 = vsyncadd [#allocation15], %s641
      %s644 = sshll.u32 [#allocation14], 4
      %s645 = int_to_ptr.vmem [resolvable:$true] %s644
      %647 = dma.vmem_to_hbm [thread:$0]  %s645, 256, %s11, [#allocation15]
    $region73: #{tpu_custom_call.1} parent=1 // pred_fallthru
      _
    // Predicated region
    $region74: #{tpu_custom_call.1} parent=1 // pred_check
      _
    $region75: #{tpu_custom_call.1} parent=1 // pred_check_branch
      %649 = sbr.rel (0) target = $region77
    $region76: #{tpu_custom_call.1} parent=1 // pred_region
      %650 = dma.done [#allocation4], 64
    $region77: #{tpu_custom_call.1} parent=1 // pred_fallthru
      _
    // Predicated region
    $region78: #{tpu_custom_call.1} parent=1 // pred_check
      _
    $region79: #{tpu_custom_call.1} parent=1 // pred_check_branch
      %652 = sbr.rel (0) target = $region81
    $region80: #{tpu_custom_call.1} parent=1 // pred_region
      %653 = dma.done [#allocation15], 256
    $region81: #{tpu_custom_call.1} parent=1 // pred_fallthru
      _
    %654 = vsyncpa [#allocation3], 1
    %655 = vsyncpa [#allocation6], 1
    %656 = vsyncpa [#allocation9], 1
    %657 = vsyncpa [#allocation12], 1
    %658 = vsyncpa [#allocation4], 1
    %659 = vsyncpa [#allocation15], 1

</llo_original>
